<compile_context>
chip_gen: v7x
topology: tpu7x:2x2x1
jax: 0.10.0
libtpu: 0.0.40
codegen_flags: <defaults>
</compile_context>

<pallas_src>
import jax
import jax.numpy as jnp
from jax.experimental import pallas as pl
from jax.experimental.pallas import tpu as pltpu


def _round_up(x, m):
    return (x + m - 1) // m * m


def make_narm_kernel(n_layers, T, B, E, H):
    """Fused GRU-over-time (packed-sequence semantics) + NARM attention."""

    def kernel(embs_ref, lenmask_ref, seqmask_ref, *refs):
        n_w = 2 * n_layers                       # per layer: fused Wi (in,3H), Wh (H,3H)
        layer_refs = refs[:n_w]
        a1t_ref, a2t_ref, vt_ref = refs[n_w], refs[n_w + 1], refs[n_w + 2]
        out_ref = refs[n_w + 3]
        gru_ref = refs[n_w + 4]                  # (T*B, H) f32 scratch: zero-padded gru_out

        bf16, f32 = jnp.bfloat16, jnp.float32

        # ---- hoisted layer-0 input projection: one big MXU matmul -------------
        # (T*B, E)bf16 @ (E, 3H)bf16 -> (T*B, 3H)f32, gate order [r | z | n].
        # TODO(synk): for large T*B, stage xproj in a bf16 VMEM scratch (or chunk
        # over T) to stay inside v7x's 64 MiB VMEM budget.
        xproj = jnp.dot(embs_ref[...], layer_refs[0][...],
                        preferred_element_type=f32)
        lenmask = lenmask_ref[...]               # (T*B, 1) f32

        # ---- GRU recurrence (torch gate order r, z, n; bias=False) ------------
        hs = [jnp.zeros((B, H), f32) for _ in range(n_layers)]
        for t in range(T):                       # T small & static -> fully unrolled
            rows = slice(t * B, (t + 1) * B)
            m = lenmask[rows, :]                 # (B, 1)
            gx = xproj[rows, :]                  # (B, 3H) hoisted layer-0 x-projection
            inp = None
            for l in range(n_layers):
                wi, wh = layer_refs[2 * l], layer_refs[2 * l + 1]
                h = hs[l]
                if l > 0:                        # deeper layers: fused x matmul per step
                    gx = jnp.dot(inp.astype(bf16), wi[...],
                                 preferred_element_type=f32)
                gh = jnp.dot(h.astype(bf16), wh[...],
                             preferred_element_type=f32)           # (B, 3H)
                r = jax.nn.sigmoid(gx[:, :H] + gh[:, :H])
                z = jax.nn.sigmoid(gx[:, H:2 * H] + gh[:, H:2 * H])
                n = jnp.tanh(gx[:, 2 * H:] + r * gh[:, 2 * H:])
                h_new = (1.0 - z) * n + z * h
                # pack_padded_sequence semantics: freeze hidden beyond lengths[b]
                h = m * h_new + (1.0 - m) * h
                hs[l] = h
                inp = h
            # pad_packed_sequence zero-pads gru_out beyond lengths[b]
            gru_ref[rows, :] = hs[-1] * m

        ht = hs[-1]                              # hidden[-1] == c_global, (B, H)

        # ---- NARM attention: alpha = v^T sigmoid(A1 h_t + mask * A2 h_T) ------
        gru_flat = gru_ref[...]                  # (T*B, H)
        q1 = jnp.dot(gru_flat.astype(bf16), a1t_ref[...],
                     preferred_element_type=f32)                  # (T*B, H) one matmul
        q2 = jnp.dot(ht.astype(bf16), a2t_ref[...],
                     preferred_element_type=f32)                  # (B, H)
        seqmask = seqmask_ref[...]               # (T*B, 1)
        vt = vt_ref[...]                         # (1, H)

        c_local = jnp.zeros((B, H), f32)
        for t in range(T):                       # unrolled; pure VPU/XLU, no matmuls
            rows = slice(t * B, (t + 1) * B)
            pre = jax.nn.sigmoid(q1[rows, :] + seqmask[rows, :] * q2)
            alpha = jnp.sum(pre * vt, axis=-1, keepdims=True)     # (B, 1)
            c_local = c_local + alpha * gru_flat[rows, :]

        # c_t = concat([c_local, c_global], 1) written without a concat temporary
        out_ref[:, :H] = c_local
        out_ref[:, H:] = ht

    return kernel


def item_score_kernel(b_ref, item_t_ref, out_ref):
    # (2H, E)bf16 @ (E, block_n)bf16 -> (2H, block_n)f32.
    # Output minor dim is the 128-multiple item axis => lane-dense unmasked stores.
    out_ref[...] = jnp.dot(b_ref[...], item_t_ref[...],
                           preferred_element_type=jnp.float32)


def init_params(key, n_items, E, H, n_layers):
    ks = jax.random.split(key, 6 + 2 * n_layers)
    emb = 0.1 * jax.random.normal(ks[0], (n_items, E), jnp.float32)
    emb = emb.at[0].set(0.0)                     # padding_idx=0
    gru = []
    for l in range(n_layers):
        in_dim = E if l == 0 else H
        w_ih = 0.1 * jax.random.normal(ks[1 + 2 * l], (3 * H, in_dim), jnp.float32)
        w_hh = 0.1 * jax.random.normal(ks[2 + 2 * l], (3 * H, H), jnp.float32)
        gru.append((w_ih, w_hh))
    a1 = 0.1 * jax.random.normal(ks[-4], (H, H), jnp.float32)
    a2 = 0.1 * jax.random.normal(ks[-3], (H, H), jnp.float32)
    v_t = 0.1 * jax.random.normal(ks[-2], (1, H), jnp.float32)
    b = 0.1 * jax.random.normal(ks[-1], (2 * H, E), jnp.float32)
    return {"emb": emb, "gru": gru, "a1": a1, "a2": a2, "v_t": v_t, "b": b}


def narm_forward(params, seq, lengths):
    emb_table = params["emb"]
    n_items, E = emb_table.shape
    H = params["a1"].shape[0]
    n_layers = len(params["gru"])
    B, T = seq.shape
    two_h = 2 * H

    # ---- glue: embedding lookup, masks, fused / pre-transposed bf16 weights ----
    embs_bt = jnp.take(emb_table, seq, axis=0)                    # (B, T, E); emb_dropout = id
    embs_flat = jnp.transpose(embs_bt, (1, 0, 2)).reshape(T * B, E).astype(jnp.bfloat16)

    t_idx = jnp.arange(T)[:, None]
    len_mask = (t_idx < lengths[None, :]).astype(jnp.float32).reshape(T * B, 1)
    seq_mask = (seq.T > 0).astype(jnp.float32).reshape(T * B, 1)

    weight_args = []
    for (w_ih, w_hh) in params["gru"]:
        # torch stacks [W_r; W_z; W_n] along dim 0 -> transpose gives fused (in, 3H)
        weight_args += [w_ih.T.astype(jnp.bfloat16), w_hh.T.astype(jnp.bfloat16)]

    inputs = ([embs_flat, len_mask, seq_mask] + weight_args +
              [params["a1"].T.astype(jnp.bfloat16),
               params["a2"].T.astype(jnp.bfloat16),
               params["v_t"].astype(jnp.float32)])

    kernel = make_narm_kernel(n_layers, T, B, E, H)
    c_t = pl.pallas_call(
        kernel,
        out_shape=jax.ShapeDtypeStruct((B, two_h), jnp.float32),
        in_specs=[pl.BlockSpec(memory_space=pltpu.MemorySpace.VMEM)] * len(inputs),
        out_specs=pl.BlockSpec(memory_space=pltpu.MemorySpace.VMEM),
        scratch_shapes=[pltpu.VMEM((T * B, H), jnp.float32)],
    )(*inputs)
    # ct_dropout = identity (eval)

    # ---- item scores, emitted already transposed: (2H, n_items) ----------------
    block_n = 512 if n_items >= 512 else _round_up(n_items, 128)
    n_pad = _round_up(n_items, block_n)
    item_t = jnp.pad(emb_table.T.astype(jnp.bfloat16),
                     ((0, 0), (0, n_pad - n_items)))              # (E, n_pad), bf16
    b_w = params["b"].astype(jnp.bfloat16)                        # (2H, E), bf16

    scores = pl.pallas_call(
        item_score_kernel,
        out_shape=jax.ShapeDtypeStruct((two_h, n_pad), jnp.float32),
        grid=(n_pad // block_n,),
        in_specs=[pl.BlockSpec((two_h, E), lambda i: (0, 0)),
                  pl.BlockSpec((E, block_n), lambda i: (0, i))],
        out_specs=pl.BlockSpec((two_h, block_n), lambda i: (0, i)),
        compiler_params=pltpu.CompilerParams(
            dimension_semantics=("parallel",)),
        cost_estimate=pl.CostEstimate(
            flops=2 * two_h * E * n_pad,
            transcendentals=0,
            bytes_accessed=two_h * E * 2 + E * n_pad * 2 + two_h * n_pad * 4),
    )(b_w, item_t)

    return c_t, scores[:, :n_items]              # (B, 2H), (2H, n_items)


def narm_reference(params, seq, lengths):
    """Pure-JAX f32 reference mirroring the PyTorch forward (eval mode)."""
    emb_table = params["emb"]
    H = params["a1"].shape[0]
    B, T = seq.shape
    embs = jnp.take(emb_table, seq, axis=0)      # (B, T, E)
    hs = [jnp.zeros((B, H), jnp.float32) for _ in params["gru"]]
    outs = []
    for t in range(T):
        x = embs[:, t, :]
        m = (t < lengths).astype(jnp.float32)[:, None]
        inp = x
        for l, (w_ih, w_hh) in enumerate(params["gru"]):
            h = hs[l]
            w_ir, w_iz, w_in = jnp.split(w_ih, 3, 0)
            w_hr, w_hz, w_hn = jnp.split(w_hh, 3, 0)
            r = jax.nn.sigmoid(inp @ w_ir.T + h @ w_hr.T)
            z = jax.nn.sigmoid(inp @ w_iz.T + h @ w_hz.T)
            n = jnp.tanh(inp @ w_in.T + r * (h @ w_hn.T))
            h_new = (1 - z) * n + z * h
            h = m * h_new + (1 - m) * h
            hs[l] = h
            inp = h
        outs.append(hs[-1] * m)
    gru_out = jnp.stack(outs, axis=1)            # (B, T, H)
    ht = hs[-1]
    q1 = (gru_out.reshape(-1, H) @ params["a1"].T).reshape(B, T, H)
    q2 = ht @ params["a2"].T
    mask = (seq > 0).astype(jnp.float32)
    pre = jax.nn.sigmoid(q1 + mask[:, :, None] * q2[:, None, :])
    alpha = (pre.reshape(-1, H) @ params["v_t"].T).reshape(B, T)
    c_local = jnp.sum(alpha[:, :, None] * gru_out, axis=1)
    c_t = jnp.concatenate([c_local, ht], axis=1)
    scores = (emb_table @ params["b"].T).T
    return c_t, scores


if __name__ == "__main__":
    key = jax.random.PRNGKey(0)
    n_items, E, H, n_layers = 64, 32, 32, 1
    B, T = 2, 8

    params = init_params(key, n_items, E, H, n_layers)

    kseq = jax.random.split(key, 2)[1]
    seq = jax.random.randint(kseq, (B, T), 1, n_items).astype(jnp.int32)
    lengths = jnp.array([T, 5], dtype=jnp.int32)
    # zero-pad beyond each sequence's length (padding token id = 0)
    seq = jnp.where(jnp.arange(T)[None, :] < lengths[:, None], seq, 0)

    c_t, scores = narm_forward(params, seq, lengths)
    jax.block_until_ready((c_t, scores))

    c_ref, s_ref = narm_reference(params, seq, lengths)
    assert c_t.shape == (B, 2 * H) and scores.shape == (2 * H, n_items)
    assert jnp.allclose(c_t, c_ref, atol=2e-2, rtol=2e-2)
    assert jnp.allclose(scores, s_ref, atol=2e-2, rtol=2e-2)

    print("KERNEL_OK")
</pallas_src>

<mosaic_0001>
module attributes {stable_mosaic.version = 11 : i64} {
  func.func @kernel(%arg0: memref<16x32xbf16, #tpu.memory_space<vmem>>, %arg1: memref<16x1xf32, #tpu.memory_space<vmem>>, %arg2: memref<16x1xf32, #tpu.memory_space<vmem>>, %arg3: memref<32x96xbf16, #tpu.memory_space<vmem>>, %arg4: memref<32x96xbf16, #tpu.memory_space<vmem>>, %arg5: memref<32x32xbf16, #tpu.memory_space<vmem>>, %arg6: memref<32x32xbf16, #tpu.memory_space<vmem>>, %arg7: memref<1x32xf32, #tpu.memory_space<vmem>>, %arg8: memref<2x64xf32, #tpu.memory_space<vmem>>, %arg9: memref<16x32xf32, #tpu.memory_space<vmem>>) attributes {dimension_semantics = [], scalar_prefetch = 0 : i64, scratch_operands = 1 : i64, tpu.core_type = #tpu.core_type<tc>} {
    %c0 = arith.constant 0 : index
    %c0_0 = arith.constant 0 : index
    %0 = vector.load %arg0[%c0, %c0_0] : memref<16x32xbf16, #tpu.memory_space<vmem>>, vector<16x32xbf16>
    %c0_1 = arith.constant 0 : index
    %c0_2 = arith.constant 0 : index
    %1 = vector.load %arg3[%c0_1, %c0_2] : memref<32x96xbf16, #tpu.memory_space<vmem>>, vector<32x96xbf16>
    %cst = arith.constant dense<0.000000e+00> : vector<16x96xf32>
    %2 = tpu.matmul %0, %1, %cst {dimension_numbers = #tpu.dot_dimension_numbers<[1], [0], [0], [1], [0, 0, 1, 1], [], []>} : vector<16x32xbf16>, vector<32x96xbf16>, vector<16x96xf32> -> vector<16x96xf32>
    %c0_3 = arith.constant 0 : index
    %c0_4 = arith.constant 0 : index
    %3 = vector.load %arg1[%c0_3, %c0_4] : memref<16x1xf32, #tpu.memory_space<vmem>>, vector<16x1xf32>
    %cst_5 = arith.constant 0.000000e+00 : f32
    %4 = vector.broadcast %cst_5 : f32 to vector<2x32xf32>
    %5 = vector.extract_strided_slice %3 {offsets = [0, 0], sizes = [2, 1], strides = [1, 1]} : vector<16x1xf32> to vector<2x1xf32>
    %6 = vector.extract_strided_slice %2 {offsets = [0, 0], sizes = [2, 96], strides = [1, 1]} : vector<16x96xf32> to vector<2x96xf32>
    %7 = arith.truncf %4 : vector<2x32xf32> to vector<2x32xbf16>
    %c0_6 = arith.constant 0 : index
    %c0_7 = arith.constant 0 : index
    %8 = vector.load %arg4[%c0_6, %c0_7] : memref<32x96xbf16, #tpu.memory_space<vmem>>, vector<32x96xbf16>
    %cst_8 = arith.constant dense<0.000000e+00> : vector<2x96xf32>
    %9 = tpu.matmul %7, %8, %cst_8 {dimension_numbers = #tpu.dot_dimension_numbers<[1], [0], [0], [1], [0, 0, 1, 1], [], []>} : vector<2x32xbf16>, vector<32x96xbf16>, vector<2x96xf32> -> vector<2x96xf32>
    %10 = vector.extract_strided_slice %6 {offsets = [0, 0], sizes = [2, 32], strides = [1, 1]} : vector<2x96xf32> to vector<2x32xf32>
    %11 = vector.extract_strided_slice %9 {offsets = [0, 0], sizes = [2, 32], strides = [1, 1]} : vector<2x96xf32> to vector<2x32xf32>
    %12 = arith.addf %10, %11 : vector<2x32xf32>
    %13 = arith.negf %12 : vector<2x32xf32>
    %14 = math.exp %13 : vector<2x32xf32>
    %cst_9 = arith.constant 1.000000e+00 : f32
    %15 = vector.broadcast %cst_9 : f32 to vector<2x32xf32>
    %16 = arith.addf %15, %14 : vector<2x32xf32>
    %17 = arith.divf %15, %16 : vector<2x32xf32>
    %18 = vector.extract_strided_slice %6 {offsets = [0, 32], sizes = [2, 32], strides = [1, 1]} : vector<2x96xf32> to vector<2x32xf32>
    %19 = vector.extract_strided_slice %9 {offsets = [0, 32], sizes = [2, 32], strides = [1, 1]} : vector<2x96xf32> to vector<2x32xf32>
    %20 = arith.addf %18, %19 : vector<2x32xf32>
    %21 = arith.negf %20 : vector<2x32xf32>
    %22 = math.exp %21 : vector<2x32xf32>
    %cst_10 = arith.constant 1.000000e+00 : f32
    %23 = vector.broadcast %cst_10 : f32 to vector<2x32xf32>
    %24 = arith.addf %23, %22 : vector<2x32xf32>
    %25 = arith.divf %23, %24 : vector<2x32xf32>
    %26 = vector.extract_strided_slice %6 {offsets = [0, 64], sizes = [2, 32], strides = [1, 1]} : vector<2x96xf32> to vector<2x32xf32>
    %27 = vector.extract_strided_slice %9 {offsets = [0, 64], sizes = [2, 32], strides = [1, 1]} : vector<2x96xf32> to vector<2x32xf32>
    %28 = arith.mulf %17, %27 : vector<2x32xf32>
    %29 = arith.addf %26, %28 : vector<2x32xf32>
    %30 = math.tanh %29 : vector<2x32xf32>
    %cst_11 = arith.constant 1.000000e+00 : f32
    %31 = vector.broadcast %cst_11 : f32 to vector<2x32xf32>
    %32 = arith.subf %31, %25 : vector<2x32xf32>
    %33 = arith.mulf %32, %30 : vector<2x32xf32>
    %34 = arith.mulf %25, %4 : vector<2x32xf32>
    %35 = arith.addf %33, %34 : vector<2x32xf32>
    %36 = vector.broadcast %5 : vector<2x1xf32> to vector<2x32xf32>
    %37 = arith.mulf %36, %35 : vector<2x32xf32>
    %cst_12 = arith.constant 1.000000e+00 : f32
    %38 = vector.broadcast %cst_12 : f32 to vector<2x1xf32>
    %39 = arith.subf %38, %5 : vector<2x1xf32>
    %40 = vector.broadcast %39 : vector<2x1xf32> to vector<2x32xf32>
    %41 = arith.mulf %40, %4 : vector<2x32xf32>
    %42 = arith.addf %37, %41 : vector<2x32xf32>
    %43 = vector.broadcast %5 : vector<2x1xf32> to vector<2x32xf32>
    %44 = arith.mulf %42, %43 : vector<2x32xf32>
    %c0_13 = arith.constant 0 : index
    %c0_14 = arith.constant 0 : index
    %45 = vector.load %arg9[%c0_13, %c0_14] : memref<16x32xf32, #tpu.memory_space<vmem>>, vector<2x32xf32>
    tpu.vector_store %arg9[%c0_13, %c0_14], %44 {strides = array<i32>} : memref<16x32xf32, #tpu.memory_space<vmem>>, vector<2x32xf32>,
    %46 = vector.extract_strided_slice %3 {offsets = [2, 0], sizes = [2, 1], strides = [1, 1]} : vector<16x1xf32> to vector<2x1xf32>
    %47 = vector.extract_strided_slice %2 {offsets = [2, 0], sizes = [2, 96], strides = [1, 1]} : vector<16x96xf32> to vector<2x96xf32>
    %48 = arith.truncf %42 : vector<2x32xf32> to vector<2x32xbf16>
    %c0_15 = arith.constant 0 : index
    %c0_16 = arith.constant 0 : index
    %49 = vector.load %arg4[%c0_15, %c0_16] : memref<32x96xbf16, #tpu.memory_space<vmem>>, vector<32x96xbf16>
    %cst_17 = arith.constant dense<0.000000e+00> : vector<2x96xf32>
    %50 = tpu.matmul %48, %49, %cst_17 {dimension_numbers = #tpu.dot_dimension_numbers<[1], [0], [0], [1], [0, 0, 1, 1], [], []>} : vector<2x32xbf16>, vector<32x96xbf16>, vector<2x96xf32> -> vector<2x96xf32>
    %51 = vector.extract_strided_slice %47 {offsets = [0, 0], sizes = [2, 32], strides = [1, 1]} : vector<2x96xf32> to vector<2x32xf32>
    %52 = vector.extract_strided_slice %50 {offsets = [0, 0], sizes = [2, 32], strides = [1, 1]} : vector<2x96xf32> to vector<2x32xf32>
    %53 = arith.addf %51, %52 : vector<2x32xf32>
    %54 = arith.negf %53 : vector<2x32xf32>
    %55 = math.exp %54 : vector<2x32xf32>
    %cst_18 = arith.constant 1.000000e+00 : f32
    %56 = vector.broadcast %cst_18 : f32 to vector<2x32xf32>
    %57 = arith.addf %56, %55 : vector<2x32xf32>
    %58 = arith.divf %56, %57 : vector<2x32xf32>
    %59 = vector.extract_strided_slice %47 {offsets = [0, 32], sizes = [2, 32], strides = [1, 1]} : vector<2x96xf32> to vector<2x32xf32>
    %60 = vector.extract_strided_slice %50 {offsets = [0, 32], sizes = [2, 32], strides = [1, 1]} : vector<2x96xf32> to vector<2x32xf32>
    %61 = arith.addf %59, %60 : vector<2x32xf32>
    %62 = arith.negf %61 : vector<2x32xf32>
    %63 = math.exp %62 : vector<2x32xf32>
    %cst_19 = arith.constant 1.000000e+00 : f32
    %64 = vector.broadcast %cst_19 : f32 to vector<2x32xf32>
    %65 = arith.addf %64, %63 : vector<2x32xf32>
    %66 = arith.divf %64, %65 : vector<2x32xf32>
    %67 = vector.extract_strided_slice %47 {offsets = [0, 64], sizes = [2, 32], strides = [1, 1]} : vector<2x96xf32> to vector<2x32xf32>
    %68 = vector.extract_strided_slice %50 {offsets = [0, 64], sizes = [2, 32], strides = [1, 1]} : vector<2x96xf32> to vector<2x32xf32>
    %69 = arith.mulf %58, %68 : vector<2x32xf32>
    %70 = arith.addf %67, %69 : vector<2x32xf32>
    %71 = math.tanh %70 : vector<2x32xf32>
    %cst_20 = arith.constant 1.000000e+00 : f32
    %72 = vector.broadcast %cst_20 : f32 to vector<2x32xf32>
    %73 = arith.subf %72, %66 : vector<2x32xf32>
    %74 = arith.mulf %73, %71 : vector<2x32xf32>
    %75 = arith.mulf %66, %42 : vector<2x32xf32>
    %76 = arith.addf %74, %75 : vector<2x32xf32>
    %77 = vector.broadcast %46 : vector<2x1xf32> to vector<2x32xf32>
    %78 = arith.mulf %77, %76 : vector<2x32xf32>
    %cst_21 = arith.constant 1.000000e+00 : f32
    %79 = vector.broadcast %cst_21 : f32 to vector<2x1xf32>
    %80 = arith.subf %79, %46 : vector<2x1xf32>
    %81 = vector.broadcast %80 : vector<2x1xf32> to vector<2x32xf32>
    %82 = arith.mulf %81, %42 : vector<2x32xf32>
    %83 = arith.addf %78, %82 : vector<2x32xf32>
    %84 = vector.broadcast %46 : vector<2x1xf32> to vector<2x32xf32>
    %85 = arith.mulf %83, %84 : vector<2x32xf32>
    %c2 = arith.constant 2 : index
    %c0_22 = arith.constant 0 : index
    %86 = vector.load %arg9[%c2, %c0_22] : memref<16x32xf32, #tpu.memory_space<vmem>>, vector<2x32xf32>
    tpu.vector_store %arg9[%c2, %c0_22], %85 {strides = array<i32>} : memref<16x32xf32, #tpu.memory_space<vmem>>, vector<2x32xf32>,
    %87 = vector.extract_strided_slice %3 {offsets = [4, 0], sizes = [2, 1], strides = [1, 1]} : vector<16x1xf32> to vector<2x1xf32>
    %88 = vector.extract_strided_slice %2 {offsets = [4, 0], sizes = [2, 96], strides = [1, 1]} : vector<16x96xf32> to vector<2x96xf32>
    %89 = arith.truncf %83 : vector<2x32xf32> to vector<2x32xbf16>
    %c0_23 = arith.constant 0 : index
    %c0_24 = arith.constant 0 : index
    %90 = vector.load %arg4[%c0_23, %c0_24] : memref<32x96xbf16, #tpu.memory_space<vmem>>, vector<32x96xbf16>
    %cst_25 = arith.constant dense<0.000000e+00> : vector<2x96xf32>
    %91 = tpu.matmul %89, %90, %cst_25 {dimension_numbers = #tpu.dot_dimension_numbers<[1], [0], [0], [1], [0, 0, 1, 1], [], []>} : vector<2x32xbf16>, vector<32x96xbf16>, vector<2x96xf32> -> vector<2x96xf32>
    %92 = vector.extract_strided_slice %88 {offsets = [0, 0], sizes = [2, 32], strides = [1, 1]} : vector<2x96xf32> to vector<2x32xf32>
    %93 = vector.extract_strided_slice %91 {offsets = [0, 0], sizes = [2, 32], strides = [1, 1]} : vector<2x96xf32> to vector<2x32xf32>
    %94 = arith.addf %92, %93 : vector<2x32xf32>
    %95 = arith.negf %94 : vector<2x32xf32>
    %96 = math.exp %95 : vector<2x32xf32>
    %cst_26 = arith.constant 1.000000e+00 : f32
    %97 = vector.broadcast %cst_26 : f32 to vector<2x32xf32>
    %98 = arith.addf %97, %96 : vector<2x32xf32>
    %99 = arith.divf %97, %98 : vector<2x32xf32>
    %100 = vector.extract_strided_slice %88 {offsets = [0, 32], sizes = [2, 32], strides = [1, 1]} : vector<2x96xf32> to vector<2x32xf32>
    %101 = vector.extract_strided_slice %91 {offsets = [0, 32], sizes = [2, 32], strides = [1, 1]} : vector<2x96xf32> to vector<2x32xf32>
    %102 = arith.addf %100, %101 : vector<2x32xf32>
    %103 = arith.negf %102 : vector<2x32xf32>
    %104 = math.exp %103 : vector<2x32xf32>
    %cst_27 = arith.constant 1.000000e+00 : f32
    %105 = vector.broadcast %cst_27 : f32 to vector<2x32xf32>
    %106 = arith.addf %105, %104 : vector<2x32xf32>
    %107 = arith.divf %105, %106 : vector<2x32xf32>
    %108 = vector.extract_strided_slice %88 {offsets = [0, 64], sizes = [2, 32], strides = [1, 1]} : vector<2x96xf32> to vector<2x32xf32>
    %109 = vector.extract_strided_slice %91 {offsets = [0, 64], sizes = [2, 32], strides = [1, 1]} : vector<2x96xf32> to vector<2x32xf32>
    %110 = arith.mulf %99, %109 : vector<2x32xf32>
    %111 = arith.addf %108, %110 : vector<2x32xf32>
    %112 = math.tanh %111 : vector<2x32xf32>
    %cst_28 = arith.constant 1.000000e+00 : f32
    %113 = vector.broadcast %cst_28 : f32 to vector<2x32xf32>
    %114 = arith.subf %113, %107 : vector<2x32xf32>
    %115 = arith.mulf %114, %112 : vector<2x32xf32>
    %116 = arith.mulf %107, %83 : vector<2x32xf32>
    %117 = arith.addf %115, %116 : vector<2x32xf32>
    %118 = vector.broadcast %87 : vector<2x1xf32> to vector<2x32xf32>
    %119 = arith.mulf %118, %117 : vector<2x32xf32>
    %cst_29 = arith.constant 1.000000e+00 : f32
    %120 = vector.broadcast %cst_29 : f32 to vector<2x1xf32>
    %121 = arith.subf %120, %87 : vector<2x1xf32>
    %122 = vector.broadcast %121 : vector<2x1xf32> to vector<2x32xf32>
    %123 = arith.mulf %122, %83 : vector<2x32xf32>
    %124 = arith.addf %119, %123 : vector<2x32xf32>
    %125 = vector.broadcast %87 : vector<2x1xf32> to vector<2x32xf32>
    %126 = arith.mulf %124, %125 : vector<2x32xf32>
    %c4 = arith.constant 4 : index
    %c0_30 = arith.constant 0 : index
    %127 = vector.load %arg9[%c4, %c0_30] : memref<16x32xf32, #tpu.memory_space<vmem>>, vector<2x32xf32>
    tpu.vector_store %arg9[%c4, %c0_30], %126 {strides = array<i32>} : memref<16x32xf32, #tpu.memory_space<vmem>>, vector<2x32xf32>,
    %128 = vector.extract_strided_slice %3 {offsets = [6, 0], sizes = [2, 1], strides = [1, 1]} : vector<16x1xf32> to vector<2x1xf32>
    %129 = vector.extract_strided_slice %2 {offsets = [6, 0], sizes = [2, 96], strides = [1, 1]} : vector<16x96xf32> to vector<2x96xf32>
    %130 = arith.truncf %124 : vector<2x32xf32> to vector<2x32xbf16>
    %c0_31 = arith.constant 0 : index
    %c0_32 = arith.constant 0 : index
    %131 = vector.load %arg4[%c0_31, %c0_32] : memref<32x96xbf16, #tpu.memory_space<vmem>>, vector<32x96xbf16>
    %cst_33 = arith.constant dense<0.000000e+00> : vector<2x96xf32>
    %132 = tpu.matmul %130, %131, %cst_33 {dimension_numbers = #tpu.dot_dimension_numbers<[1], [0], [0], [1], [0, 0, 1, 1], [], []>} : vector<2x32xbf16>, vector<32x96xbf16>, vector<2x96xf32> -> vector<2x96xf32>
    %133 = vector.extract_strided_slice %129 {offsets = [0, 0], sizes = [2, 32], strides = [1, 1]} : vector<2x96xf32> to vector<2x32xf32>
    %134 = vector.extract_strided_slice %132 {offsets = [0, 0], sizes = [2, 32], strides = [1, 1]} : vector<2x96xf32> to vector<2x32xf32>
    %135 = arith.addf %133, %134 : vector<2x32xf32>
    %136 = arith.negf %135 : vector<2x32xf32>
    %137 = math.exp %136 : vector<2x32xf32>
    %cst_34 = arith.constant 1.000000e+00 : f32
    %138 = vector.broadcast %cst_34 : f32 to vector<2x32xf32>
    %139 = arith.addf %138, %137 : vector<2x32xf32>
    %140 = arith.divf %138, %139 : vector<2x32xf32>
    %141 = vector.extract_strided_slice %129 {offsets = [0, 32], sizes = [2, 32], strides = [1, 1]} : vector<2x96xf32> to vector<2x32xf32>
    %142 = vector.extract_strided_slice %132 {offsets = [0, 32], sizes = [2, 32], strides = [1, 1]} : vector<2x96xf32> to vector<2x32xf32>
    %143 = arith.addf %141, %142 : vector<2x32xf32>
    %144 = arith.negf %143 : vector<2x32xf32>
    %145 = math.exp %144 : vector<2x32xf32>
    %cst_35 = arith.constant 1.000000e+00 : f32
    %146 = vector.broadcast %cst_35 : f32 to vector<2x32xf32>
    %147 = arith.addf %146, %145 : vector<2x32xf32>
    %148 = arith.divf %146, %147 : vector<2x32xf32>
    %149 = vector.extract_strided_slice %129 {offsets = [0, 64], sizes = [2, 32], strides = [1, 1]} : vector<2x96xf32> to vector<2x32xf32>
    %150 = vector.extract_strided_slice %132 {offsets = [0, 64], sizes = [2, 32], strides = [1, 1]} : vector<2x96xf32> to vector<2x32xf32>
    %151 = arith.mulf %140, %150 : vector<2x32xf32>
    %152 = arith.addf %149, %151 : vector<2x32xf32>
    %153 = math.tanh %152 : vector<2x32xf32>
    %cst_36 = arith.constant 1.000000e+00 : f32
    %154 = vector.broadcast %cst_36 : f32 to vector<2x32xf32>
    %155 = arith.subf %154, %148 : vector<2x32xf32>
    %156 = arith.mulf %155, %153 : vector<2x32xf32>
    %157 = arith.mulf %148, %124 : vector<2x32xf32>
    %158 = arith.addf %156, %157 : vector<2x32xf32>
    %159 = vector.broadcast %128 : vector<2x1xf32> to vector<2x32xf32>
    %160 = arith.mulf %159, %158 : vector<2x32xf32>
    %cst_37 = arith.constant 1.000000e+00 : f32
    %161 = vector.broadcast %cst_37 : f32 to vector<2x1xf32>
    %162 = arith.subf %161, %128 : vector<2x1xf32>
    %163 = vector.broadcast %162 : vector<2x1xf32> to vector<2x32xf32>
    %164 = arith.mulf %163, %124 : vector<2x32xf32>
    %165 = arith.addf %160, %164 : vector<2x32xf32>
    %166 = vector.broadcast %128 : vector<2x1xf32> to vector<2x32xf32>
    %167 = arith.mulf %165, %166 : vector<2x32xf32>
    %c6 = arith.constant 6 : index
    %c0_38 = arith.constant 0 : index
    %168 = vector.load %arg9[%c6, %c0_38] : memref<16x32xf32, #tpu.memory_space<vmem>>, vector<2x32xf32>
    tpu.vector_store %arg9[%c6, %c0_38], %167 {strides = array<i32>} : memref<16x32xf32, #tpu.memory_space<vmem>>, vector<2x32xf32>,
    %169 = vector.extract_strided_slice %3 {offsets = [8, 0], sizes = [2, 1], strides = [1, 1]} : vector<16x1xf32> to vector<2x1xf32>
    %170 = vector.extract_strided_slice %2 {offsets = [8, 0], sizes = [2, 96], strides = [1, 1]} : vector<16x96xf32> to vector<2x96xf32>
    %171 = arith.truncf %165 : vector<2x32xf32> to vector<2x32xbf16>
    %c0_39 = arith.constant 0 : index
    %c0_40 = arith.constant 0 : index
    %172 = vector.load %arg4[%c0_39, %c0_40] : memref<32x96xbf16, #tpu.memory_space<vmem>>, vector<32x96xbf16>
    %cst_41 = arith.constant dense<0.000000e+00> : vector<2x96xf32>
    %173 = tpu.matmul %171, %172, %cst_41 {dimension_numbers = #tpu.dot_dimension_numbers<[1], [0], [0], [1], [0, 0, 1, 1], [], []>} : vector<2x32xbf16>, vector<32x96xbf16>, vector<2x96xf32> -> vector<2x96xf32>
    %174 = vector.extract_strided_slice %170 {offsets = [0, 0], sizes = [2, 32], strides = [1, 1]} : vector<2x96xf32> to vector<2x32xf32>
    %175 = vector.extract_strided_slice %173 {offsets = [0, 0], sizes = [2, 32], strides = [1, 1]} : vector<2x96xf32> to vector<2x32xf32>
    %176 = arith.addf %174, %175 : vector<2x32xf32>
    %177 = arith.negf %176 : vector<2x32xf32>
    %178 = math.exp %177 : vector<2x32xf32>
    %cst_42 = arith.constant 1.000000e+00 : f32
    %179 = vector.broadcast %cst_42 : f32 to vector<2x32xf32>
    %180 = arith.addf %179, %178 : vector<2x32xf32>
    %181 = arith.divf %179, %180 : vector<2x32xf32>
    %182 = vector.extract_strided_slice %170 {offsets = [0, 32], sizes = [2, 32], strides = [1, 1]} : vector<2x96xf32> to vector<2x32xf32>
    %183 = vector.extract_strided_slice %173 {offsets = [0, 32], sizes = [2, 32], strides = [1, 1]} : vector<2x96xf32> to vector<2x32xf32>
    %184 = arith.addf %182, %183 : vector<2x32xf32>
    %185 = arith.negf %184 : vector<2x32xf32>
    %186 = math.exp %185 : vector<2x32xf32>
    %cst_43 = arith.constant 1.000000e+00 : f32
    %187 = vector.broadcast %cst_43 : f32 to vector<2x32xf32>
    %188 = arith.addf %187, %186 : vector<2x32xf32>
    %189 = arith.divf %187, %188 : vector<2x32xf32>
    %190 = vector.extract_strided_slice %170 {offsets = [0, 64], sizes = [2, 32], strides = [1, 1]} : vector<2x96xf32> to vector<2x32xf32>
    %191 = vector.extract_strided_slice %173 {offsets = [0, 64], sizes = [2, 32], strides = [1, 1]} : vector<2x96xf32> to vector<2x32xf32>
    %192 = arith.mulf %181, %191 : vector<2x32xf32>
    %193 = arith.addf %190, %192 : vector<2x32xf32>
    %194 = math.tanh %193 : vector<2x32xf32>
    %cst_44 = arith.constant 1.000000e+00 : f32
    %195 = vector.broadcast %cst_44 : f32 to vector<2x32xf32>
    %196 = arith.subf %195, %189 : vector<2x32xf32>
    %197 = arith.mulf %196, %194 : vector<2x32xf32>
    %198 = arith.mulf %189, %165 : vector<2x32xf32>
    %199 = arith.addf %197, %198 : vector<2x32xf32>
    %200 = vector.broadcast %169 : vector<2x1xf32> to vector<2x32xf32>
    %201 = arith.mulf %200, %199 : vector<2x32xf32>
    %cst_45 = arith.constant 1.000000e+00 : f32
    %202 = vector.broadcast %cst_45 : f32 to vector<2x1xf32>
    %203 = arith.subf %202, %169 : vector<2x1xf32>
    %204 = vector.broadcast %203 : vector<2x1xf32> to vector<2x32xf32>
    %205 = arith.mulf %204, %165 : vector<2x32xf32>
    %206 = arith.addf %201, %205 : vector<2x32xf32>
    %207 = vector.broadcast %169 : vector<2x1xf32> to vector<2x32xf32>
    %208 = arith.mulf %206, %207 : vector<2x32xf32>
    %c8 = arith.constant 8 : index
    %c0_46 = arith.constant 0 : index
    %209 = vector.load %arg9[%c8, %c0_46] : memref<16x32xf32, #tpu.memory_space<vmem>>, vector<2x32xf32>
    tpu.vector_store %arg9[%c8, %c0_46], %208 {strides = array<i32>} : memref<16x32xf32, #tpu.memory_space<vmem>>, vector<2x32xf32>,
    %210 = vector.extract_strided_slice %3 {offsets = [10, 0], sizes = [2, 1], strides = [1, 1]} : vector<16x1xf32> to vector<2x1xf32>
    %211 = vector.extract_strided_slice %2 {offsets = [10, 0], sizes = [2, 96], strides = [1, 1]} : vector<16x96xf32> to vector<2x96xf32>
    %212 = arith.truncf %206 : vector<2x32xf32> to vector<2x32xbf16>
    %c0_47 = arith.constant 0 : index
    %c0_48 = arith.constant 0 : index
    %213 = vector.load %arg4[%c0_47, %c0_48] : memref<32x96xbf16, #tpu.memory_space<vmem>>, vector<32x96xbf16>
    %cst_49 = arith.constant dense<0.000000e+00> : vector<2x96xf32>
    %214 = tpu.matmul %212, %213, %cst_49 {dimension_numbers = #tpu.dot_dimension_numbers<[1], [0], [0], [1], [0, 0, 1, 1], [], []>} : vector<2x32xbf16>, vector<32x96xbf16>, vector<2x96xf32> -> vector<2x96xf32>
    %215 = vector.extract_strided_slice %211 {offsets = [0, 0], sizes = [2, 32], strides = [1, 1]} : vector<2x96xf32> to vector<2x32xf32>
    %216 = vector.extract_strided_slice %214 {offsets = [0, 0], sizes = [2, 32], strides = [1, 1]} : vector<2x96xf32> to vector<2x32xf32>
    %217 = arith.addf %215, %216 : vector<2x32xf32>
    %218 = arith.negf %217 : vector<2x32xf32>
    %219 = math.exp %218 : vector<2x32xf32>
    %cst_50 = arith.constant 1.000000e+00 : f32
    %220 = vector.broadcast %cst_50 : f32 to vector<2x32xf32>
    %221 = arith.addf %220, %219 : vector<2x32xf32>
    %222 = arith.divf %220, %221 : vector<2x32xf32>
    %223 = vector.extract_strided_slice %211 {offsets = [0, 32], sizes = [2, 32], strides = [1, 1]} : vector<2x96xf32> to vector<2x32xf32>
    %224 = vector.extract_strided_slice %214 {offsets = [0, 32], sizes = [2, 32], strides = [1, 1]} : vector<2x96xf32> to vector<2x32xf32>
    %225 = arith.addf %223, %224 : vector<2x32xf32>
    %226 = arith.negf %225 : vector<2x32xf32>
    %227 = math.exp %226 : vector<2x32xf32>
    %cst_51 = arith.constant 1.000000e+00 : f32
    %228 = vector.broadcast %cst_51 : f32 to vector<2x32xf32>
    %229 = arith.addf %228, %227 : vector<2x32xf32>
    %230 = arith.divf %228, %229 : vector<2x32xf32>
    %231 = vector.extract_strided_slice %211 {offsets = [0, 64], sizes = [2, 32], strides = [1, 1]} : vector<2x96xf32> to vector<2x32xf32>
    %232 = vector.extract_strided_slice %214 {offsets = [0, 64], sizes = [2, 32], strides = [1, 1]} : vector<2x96xf32> to vector<2x32xf32>
    %233 = arith.mulf %222, %232 : vector<2x32xf32>
    %234 = arith.addf %231, %233 : vector<2x32xf32>
    %235 = math.tanh %234 : vector<2x32xf32>
    %cst_52 = arith.constant 1.000000e+00 : f32
    %236 = vector.broadcast %cst_52 : f32 to vector<2x32xf32>
    %237 = arith.subf %236, %230 : vector<2x32xf32>
    %238 = arith.mulf %237, %235 : vector<2x32xf32>
    %239 = arith.mulf %230, %206 : vector<2x32xf32>
    %240 = arith.addf %238, %239 : vector<2x32xf32>
    %241 = vector.broadcast %210 : vector<2x1xf32> to vector<2x32xf32>
    %242 = arith.mulf %241, %240 : vector<2x32xf32>
    %cst_53 = arith.constant 1.000000e+00 : f32
    %243 = vector.broadcast %cst_53 : f32 to vector<2x1xf32>
    %244 = arith.subf %243, %210 : vector<2x1xf32>
    %245 = vector.broadcast %244 : vector<2x1xf32> to vector<2x32xf32>
    %246 = arith.mulf %245, %206 : vector<2x32xf32>
    %247 = arith.addf %242, %246 : vector<2x32xf32>
    %248 = vector.broadcast %210 : vector<2x1xf32> to vector<2x32xf32>
    %249 = arith.mulf %247, %248 : vector<2x32xf32>
    %c10 = arith.constant 10 : index
    %c0_54 = arith.constant 0 : index
    %250 = vector.load %arg9[%c10, %c0_54] : memref<16x32xf32, #tpu.memory_space<vmem>>, vector<2x32xf32>
    tpu.vector_store %arg9[%c10, %c0_54], %249 {strides = array<i32>} : memref<16x32xf32, #tpu.memory_space<vmem>>, vector<2x32xf32>,
    %251 = vector.extract_strided_slice %3 {offsets = [12, 0], sizes = [2, 1], strides = [1, 1]} : vector<16x1xf32> to vector<2x1xf32>
    %252 = vector.extract_strided_slice %2 {offsets = [12, 0], sizes = [2, 96], strides = [1, 1]} : vector<16x96xf32> to vector<2x96xf32>
    %253 = arith.truncf %247 : vector<2x32xf32> to vector<2x32xbf16>
    %c0_55 = arith.constant 0 : index
    %c0_56 = arith.constant 0 : index
    %254 = vector.load %arg4[%c0_55, %c0_56] : memref<32x96xbf16, #tpu.memory_space<vmem>>, vector<32x96xbf16>
    %cst_57 = arith.constant dense<0.000000e+00> : vector<2x96xf32>
    %255 = tpu.matmul %253, %254, %cst_57 {dimension_numbers = #tpu.dot_dimension_numbers<[1], [0], [0], [1], [0, 0, 1, 1], [], []>} : vector<2x32xbf16>, vector<32x96xbf16>, vector<2x96xf32> -> vector<2x96xf32>
    %256 = vector.extract_strided_slice %252 {offsets = [0, 0], sizes = [2, 32], strides = [1, 1]} : vector<2x96xf32> to vector<2x32xf32>
    %257 = vector.extract_strided_slice %255 {offsets = [0, 0], sizes = [2, 32], strides = [1, 1]} : vector<2x96xf32> to vector<2x32xf32>
    %258 = arith.addf %256, %257 : vector<2x32xf32>
    %259 = arith.negf %258 : vector<2x32xf32>
    %260 = math.exp %259 : vector<2x32xf32>
    %cst_58 = arith.constant 1.000000e+00 : f32
    %261 = vector.broadcast %cst_58 : f32 to vector<2x32xf32>
    %262 = arith.addf %261, %260 : vector<2x32xf32>
    %263 = arith.divf %261, %262 : vector<2x32xf32>
    %264 = vector.extract_strided_slice %252 {offsets = [0, 32], sizes = [2, 32], strides = [1, 1]} : vector<2x96xf32> to vector<2x32xf32>
    %265 = vector.extract_strided_slice %255 {offsets = [0, 32], sizes = [2, 32], strides = [1, 1]} : vector<2x96xf32> to vector<2x32xf32>
    %266 = arith.addf %264, %265 : vector<2x32xf32>
    %267 = arith.negf %266 : vector<2x32xf32>
    %268 = math.exp %267 : vector<2x32xf32>
    %cst_59 = arith.constant 1.000000e+00 : f32
    %269 = vector.broadcast %cst_59 : f32 to vector<2x32xf32>
    %270 = arith.addf %269, %268 : vector<2x32xf32>
    %271 = arith.divf %269, %270 : vector<2x32xf32>
    %272 = vector.extract_strided_slice %252 {offsets = [0, 64], sizes = [2, 32], strides = [1, 1]} : vector<2x96xf32> to vector<2x32xf32>
    %273 = vector.extract_strided_slice %255 {offsets = [0, 64], sizes = [2, 32], strides = [1, 1]} : vector<2x96xf32> to vector<2x32xf32>
    %274 = arith.mulf %263, %273 : vector<2x32xf32>
    %275 = arith.addf %272, %274 : vector<2x32xf32>
    %276 = math.tanh %275 : vector<2x32xf32>
    %cst_60 = arith.constant 1.000000e+00 : f32
    %277 = vector.broadcast %cst_60 : f32 to vector<2x32xf32>
    %278 = arith.subf %277, %271 : vector<2x32xf32>
    %279 = arith.mulf %278, %276 : vector<2x32xf32>
    %280 = arith.mulf %271, %247 : vector<2x32xf32>
    %281 = arith.addf %279, %280 : vector<2x32xf32>
    %282 = vector.broadcast %251 : vector<2x1xf32> to vector<2x32xf32>
    %283 = arith.mulf %282, %281 : vector<2x32xf32>
    %cst_61 = arith.constant 1.000000e+00 : f32
    %284 = vector.broadcast %cst_61 : f32 to vector<2x1xf32>
    %285 = arith.subf %284, %251 : vector<2x1xf32>
    %286 = vector.broadcast %285 : vector<2x1xf32> to vector<2x32xf32>
    %287 = arith.mulf %286, %247 : vector<2x32xf32>
    %288 = arith.addf %283, %287 : vector<2x32xf32>
    %289 = vector.broadcast %251 : vector<2x1xf32> to vector<2x32xf32>
    %290 = arith.mulf %288, %289 : vector<2x32xf32>
    %c12 = arith.constant 12 : index
    %c0_62 = arith.constant 0 : index
    %291 = vector.load %arg9[%c12, %c0_62] : memref<16x32xf32, #tpu.memory_space<vmem>>, vector<2x32xf32>
    tpu.vector_store %arg9[%c12, %c0_62], %290 {strides = array<i32>} : memref<16x32xf32, #tpu.memory_space<vmem>>, vector<2x32xf32>,
    %292 = vector.extract_strided_slice %3 {offsets = [14, 0], sizes = [2, 1], strides = [1, 1]} : vector<16x1xf32> to vector<2x1xf32>
    %293 = vector.extract_strided_slice %2 {offsets = [14, 0], sizes = [2, 96], strides = [1, 1]} : vector<16x96xf32> to vector<2x96xf32>
    %294 = arith.truncf %288 : vector<2x32xf32> to vector<2x32xbf16>
    %c0_63 = arith.constant 0 : index
    %c0_64 = arith.constant 0 : index
    %295 = vector.load %arg4[%c0_63, %c0_64] : memref<32x96xbf16, #tpu.memory_space<vmem>>, vector<32x96xbf16>
    %cst_65 = arith.constant dense<0.000000e+00> : vector<2x96xf32>
    %296 = tpu.matmul %294, %295, %cst_65 {dimension_numbers = #tpu.dot_dimension_numbers<[1], [0], [0], [1], [0, 0, 1, 1], [], []>} : vector<2x32xbf16>, vector<32x96xbf16>, vector<2x96xf32> -> vector<2x96xf32>
    %297 = vector.extract_strided_slice %293 {offsets = [0, 0], sizes = [2, 32], strides = [1, 1]} : vector<2x96xf32> to vector<2x32xf32>
    %298 = vector.extract_strided_slice %296 {offsets = [0, 0], sizes = [2, 32], strides = [1, 1]} : vector<2x96xf32> to vector<2x32xf32>
    %299 = arith.addf %297, %298 : vector<2x32xf32>
    %300 = arith.negf %299 : vector<2x32xf32>
    %301 = math.exp %300 : vector<2x32xf32>
    %cst_66 = arith.constant 1.000000e+00 : f32
    %302 = vector.broadcast %cst_66 : f32 to vector<2x32xf32>
    %303 = arith.addf %302, %301 : vector<2x32xf32>
    %304 = arith.divf %302, %303 : vector<2x32xf32>
    %305 = vector.extract_strided_slice %293 {offsets = [0, 32], sizes = [2, 32], strides = [1, 1]} : vector<2x96xf32> to vector<2x32xf32>
    %306 = vector.extract_strided_slice %296 {offsets = [0, 32], sizes = [2, 32], strides = [1, 1]} : vector<2x96xf32> to vector<2x32xf32>
    %307 = arith.addf %305, %306 : vector<2x32xf32>
    %308 = arith.negf %307 : vector<2x32xf32>
    %309 = math.exp %308 : vector<2x32xf32>
    %cst_67 = arith.constant 1.000000e+00 : f32
    %310 = vector.broadcast %cst_67 : f32 to vector<2x32xf32>
    %311 = arith.addf %310, %309 : vector<2x32xf32>
    %312 = arith.divf %310, %311 : vector<2x32xf32>
    %313 = vector.extract_strided_slice %293 {offsets = [0, 64], sizes = [2, 32], strides = [1, 1]} : vector<2x96xf32> to vector<2x32xf32>
    %314 = vector.extract_strided_slice %296 {offsets = [0, 64], sizes = [2, 32], strides = [1, 1]} : vector<2x96xf32> to vector<2x32xf32>
    %315 = arith.mulf %304, %314 : vector<2x32xf32>
    %316 = arith.addf %313, %315 : vector<2x32xf32>
    %317 = math.tanh %316 : vector<2x32xf32>
    %cst_68 = arith.constant 1.000000e+00 : f32
    %318 = vector.broadcast %cst_68 : f32 to vector<2x32xf32>
    %319 = arith.subf %318, %312 : vector<2x32xf32>
    %320 = arith.mulf %319, %317 : vector<2x32xf32>
    %321 = arith.mulf %312, %288 : vector<2x32xf32>
    %322 = arith.addf %320, %321 : vector<2x32xf32>
    %323 = vector.broadcast %292 : vector<2x1xf32> to vector<2x32xf32>
    %324 = arith.mulf %323, %322 : vector<2x32xf32>
    %cst_69 = arith.constant 1.000000e+00 : f32
    %325 = vector.broadcast %cst_69 : f32 to vector<2x1xf32>
    %326 = arith.subf %325, %292 : vector<2x1xf32>
    %327 = vector.broadcast %326 : vector<2x1xf32> to vector<2x32xf32>
    %328 = arith.mulf %327, %288 : vector<2x32xf32>
    %329 = arith.addf %324, %328 : vector<2x32xf32>
    %330 = vector.broadcast %292 : vector<2x1xf32> to vector<2x32xf32>
    %331 = arith.mulf %329, %330 : vector<2x32xf32>
    %c14 = arith.constant 14 : index
    %c0_70 = arith.constant 0 : index
    %332 = vector.load %arg9[%c14, %c0_70] : memref<16x32xf32, #tpu.memory_space<vmem>>, vector<2x32xf32>
    tpu.vector_store %arg9[%c14, %c0_70], %331 {strides = array<i32>} : memref<16x32xf32, #tpu.memory_space<vmem>>, vector<2x32xf32>,
    %c0_71 = arith.constant 0 : index
    %c0_72 = arith.constant 0 : index
    %333 = vector.load %arg9[%c0_71, %c0_72] : memref<16x32xf32, #tpu.memory_space<vmem>>, vector<16x32xf32>
    %334 = arith.truncf %333 : vector<16x32xf32> to vector<16x32xbf16>
    %c0_73 = arith.constant 0 : index
    %c0_74 = arith.constant 0 : index
    %335 = vector.load %arg5[%c0_73, %c0_74] : memref<32x32xbf16, #tpu.memory_space<vmem>>, vector<32x32xbf16>
    %cst_75 = arith.constant dense<0.000000e+00> : vector<16x32xf32>
    %336 = tpu.matmul %334, %335, %cst_75 {dimension_numbers = #tpu.dot_dimension_numbers<[1], [0], [0], [1], [0, 0, 1, 1], [], []>} : vector<16x32xbf16>, vector<32x32xbf16>, vector<16x32xf32> -> vector<16x32xf32>
    %337 = arith.truncf %329 : vector<2x32xf32> to vector<2x32xbf16>
    %c0_76 = arith.constant 0 : index
    %c0_77 = arith.constant 0 : index
    %338 = vector.load %arg6[%c0_76, %c0_77] : memref<32x32xbf16, #tpu.memory_space<vmem>>, vector<32x32xbf16>
    %cst_78 = arith.constant dense<0.000000e+00> : vector<2x32xf32>
    %339 = tpu.matmul %337, %338, %cst_78 {dimension_numbers = #tpu.dot_dimension_numbers<[1], [0], [0], [1], [0, 0, 1, 1], [], []>} : vector<2x32xbf16>, vector<32x32xbf16>, vector<2x32xf32> -> vector<2x32xf32>
    %c0_79 = arith.constant 0 : index
    %c0_80 = arith.constant 0 : index
    %340 = vector.load %arg2[%c0_79, %c0_80] : memref<16x1xf32, #tpu.memory_space<vmem>>, vector<16x1xf32>
    %c0_81 = arith.constant 0 : index
    %c0_82 = arith.constant 0 : index
    %341 = vector.load %arg7[%c0_81, %c0_82] : memref<1x32xf32, #tpu.memory_space<vmem>>, vector<1x32xf32>
    %cst_83 = arith.constant 0.000000e+00 : f32
    %342 = vector.broadcast %cst_83 : f32 to vector<2x32xf32>
    %343 = vector.extract_strided_slice %336 {offsets = [0, 0], sizes = [2, 32], strides = [1, 1]} : vector<16x32xf32> to vector<2x32xf32>
    %344 = vector.extract_strided_slice %340 {offsets = [0, 0], sizes = [2, 1], strides = [1, 1]} : vector<16x1xf32> to vector<2x1xf32>
    %345 = vector.broadcast %344 : vector<2x1xf32> to vector<2x32xf32>
    %346 = arith.mulf %345, %339 : vector<2x32xf32>
    %347 = arith.addf %343, %346 : vector<2x32xf32>
    %348 = arith.negf %347 : vector<2x32xf32>
    %349 = math.exp %348 : vector<2x32xf32>
    %cst_84 = arith.constant 1.000000e+00 : f32
    %350 = vector.broadcast %cst_84 : f32 to vector<2x32xf32>
    %351 = arith.addf %350, %349 : vector<2x32xf32>
    %352 = arith.divf %350, %351 : vector<2x32xf32>
    %353 = vector.broadcast %341 : vector<1x32xf32> to vector<2x32xf32>
    %354 = arith.mulf %352, %353 : vector<2x32xf32>
    %cst_85 = arith.constant dense<0.000000e+00> : vector<2xf32>
    %355 = vector.multi_reduction <add>, %354, %cst_85 [1] : vector<2x32xf32> to vector<2xf32>
    %356 = vector.shape_cast %355 : vector<2xf32> to vector<2x1xf32>
    %357 = vector.extract_strided_slice %333 {offsets = [0, 0], sizes = [2, 32], strides = [1, 1]} : vector<16x32xf32> to vector<2x32xf32>
    %358 = vector.broadcast %356 : vector<2x1xf32> to vector<2x32xf32>
    %359 = arith.mulf %358, %357 : vector<2x32xf32>
    %360 = arith.addf %342, %359 : vector<2x32xf32>
    %361 = vector.extract_strided_slice %336 {offsets = [2, 0], sizes = [2, 32], strides = [1, 1]} : vector<16x32xf32> to vector<2x32xf32>
    %362 = vector.extract_strided_slice %340 {offsets = [2, 0], sizes = [2, 1], strides = [1, 1]} : vector<16x1xf32> to vector<2x1xf32>
    %363 = vector.broadcast %362 : vector<2x1xf32> to vector<2x32xf32>
    %364 = arith.mulf %363, %339 : vector<2x32xf32>
    %365 = arith.addf %361, %364 : vector<2x32xf32>
    %366 = arith.negf %365 : vector<2x32xf32>
    %367 = math.exp %366 : vector<2x32xf32>
    %cst_86 = arith.constant 1.000000e+00 : f32
    %368 = vector.broadcast %cst_86 : f32 to vector<2x32xf32>
    %369 = arith.addf %368, %367 : vector<2x32xf32>
    %370 = arith.divf %368, %369 : vector<2x32xf32>
    %371 = vector.broadcast %341 : vector<1x32xf32> to vector<2x32xf32>
    %372 = arith.mulf %370, %371 : vector<2x32xf32>
    %cst_87 = arith.constant dense<0.000000e+00> : vector<2xf32>
    %373 = vector.multi_reduction <add>, %372, %cst_87 [1] : vector<2x32xf32> to vector<2xf32>
    %374 = vector.shape_cast %373 : vector<2xf32> to vector<2x1xf32>
    %375 = vector.extract_strided_slice %333 {offsets = [2, 0], sizes = [2, 32], strides = [1, 1]} : vector<16x32xf32> to vector<2x32xf32>
    %376 = vector.broadcast %374 : vector<2x1xf32> to vector<2x32xf32>
    %377 = arith.mulf %376, %375 : vector<2x32xf32>
    %378 = arith.addf %360, %377 : vector<2x32xf32>
    %379 = vector.extract_strided_slice %336 {offsets = [4, 0], sizes = [2, 32], strides = [1, 1]} : vector<16x32xf32> to vector<2x32xf32>
    %380 = vector.extract_strided_slice %340 {offsets = [4, 0], sizes = [2, 1], strides = [1, 1]} : vector<16x1xf32> to vector<2x1xf32>
    %381 = vector.broadcast %380 : vector<2x1xf32> to vector<2x32xf32>
    %382 = arith.mulf %381, %339 : vector<2x32xf32>
    %383 = arith.addf %379, %382 : vector<2x32xf32>
    %384 = arith.negf %383 : vector<2x32xf32>
    %385 = math.exp %384 : vector<2x32xf32>
    %cst_88 = arith.constant 1.000000e+00 : f32
    %386 = vector.broadcast %cst_88 : f32 to vector<2x32xf32>
    %387 = arith.addf %386, %385 : vector<2x32xf32>
    %388 = arith.divf %386, %387 : vector<2x32xf32>
    %389 = vector.broadcast %341 : vector<1x32xf32> to vector<2x32xf32>
    %390 = arith.mulf %388, %389 : vector<2x32xf32>
    %cst_89 = arith.constant dense<0.000000e+00> : vector<2xf32>
    %391 = vector.multi_reduction <add>, %390, %cst_89 [1] : vector<2x32xf32> to vector<2xf32>
    %392 = vector.shape_cast %391 : vector<2xf32> to vector<2x1xf32>
    %393 = vector.extract_strided_slice %333 {offsets = [4, 0], sizes = [2, 32], strides = [1, 1]} : vector<16x32xf32> to vector<2x32xf32>
    %394 = vector.broadcast %392 : vector<2x1xf32> to vector<2x32xf32>
    %395 = arith.mulf %394, %393 : vector<2x32xf32>
    %396 = arith.addf %378, %395 : vector<2x32xf32>
    %397 = vector.extract_strided_slice %336 {offsets = [6, 0], sizes = [2, 32], strides = [1, 1]} : vector<16x32xf32> to vector<2x32xf32>
    %398 = vector.extract_strided_slice %340 {offsets = [6, 0], sizes = [2, 1], strides = [1, 1]} : vector<16x1xf32> to vector<2x1xf32>
    %399 = vector.broadcast %398 : vector<2x1xf32> to vector<2x32xf32>
    %400 = arith.mulf %399, %339 : vector<2x32xf32>
    %401 = arith.addf %397, %400 : vector<2x32xf32>
    %402 = arith.negf %401 : vector<2x32xf32>
    %403 = math.exp %402 : vector<2x32xf32>
    %cst_90 = arith.constant 1.000000e+00 : f32
    %404 = vector.broadcast %cst_90 : f32 to vector<2x32xf32>
    %405 = arith.addf %404, %403 : vector<2x32xf32>
    %406 = arith.divf %404, %405 : vector<2x32xf32>
    %407 = vector.broadcast %341 : vector<1x32xf32> to vector<2x32xf32>
    %408 = arith.mulf %406, %407 : vector<2x32xf32>
    %cst_91 = arith.constant dense<0.000000e+00> : vector<2xf32>
    %409 = vector.multi_reduction <add>, %408, %cst_91 [1] : vector<2x32xf32> to vector<2xf32>
    %410 = vector.shape_cast %409 : vector<2xf32> to vector<2x1xf32>
    %411 = vector.extract_strided_slice %333 {offsets = [6, 0], sizes = [2, 32], strides = [1, 1]} : vector<16x32xf32> to vector<2x32xf32>
    %412 = vector.broadcast %410 : vector<2x1xf32> to vector<2x32xf32>
    %413 = arith.mulf %412, %411 : vector<2x32xf32>
    %414 = arith.addf %396, %413 : vector<2x32xf32>
    %415 = vector.extract_strided_slice %336 {offsets = [8, 0], sizes = [2, 32], strides = [1, 1]} : vector<16x32xf32> to vector<2x32xf32>
    %416 = vector.extract_strided_slice %340 {offsets = [8, 0], sizes = [2, 1], strides = [1, 1]} : vector<16x1xf32> to vector<2x1xf32>
    %417 = vector.broadcast %416 : vector<2x1xf32> to vector<2x32xf32>
    %418 = arith.mulf %417, %339 : vector<2x32xf32>
    %419 = arith.addf %415, %418 : vector<2x32xf32>
    %420 = arith.negf %419 : vector<2x32xf32>
    %421 = math.exp %420 : vector<2x32xf32>
    %cst_92 = arith.constant 1.000000e+00 : f32
    %422 = vector.broadcast %cst_92 : f32 to vector<2x32xf32>
    %423 = arith.addf %422, %421 : vector<2x32xf32>
    %424 = arith.divf %422, %423 : vector<2x32xf32>
    %425 = vector.broadcast %341 : vector<1x32xf32> to vector<2x32xf32>
    %426 = arith.mulf %424, %425 : vector<2x32xf32>
    %cst_93 = arith.constant dense<0.000000e+00> : vector<2xf32>
    %427 = vector.multi_reduction <add>, %426, %cst_93 [1] : vector<2x32xf32> to vector<2xf32>
    %428 = vector.shape_cast %427 : vector<2xf32> to vector<2x1xf32>
    %429 = vector.extract_strided_slice %333 {offsets = [8, 0], sizes = [2, 32], strides = [1, 1]} : vector<16x32xf32> to vector<2x32xf32>
    %430 = vector.broadcast %428 : vector<2x1xf32> to vector<2x32xf32>
    %431 = arith.mulf %430, %429 : vector<2x32xf32>
    %432 = arith.addf %414, %431 : vector<2x32xf32>
    %433 = vector.extract_strided_slice %336 {offsets = [10, 0], sizes = [2, 32], strides = [1, 1]} : vector<16x32xf32> to vector<2x32xf32>
    %434 = vector.extract_strided_slice %340 {offsets = [10, 0], sizes = [2, 1], strides = [1, 1]} : vector<16x1xf32> to vector<2x1xf32>
    %435 = vector.broadcast %434 : vector<2x1xf32> to vector<2x32xf32>
    %436 = arith.mulf %435, %339 : vector<2x32xf32>
    %437 = arith.addf %433, %436 : vector<2x32xf32>
    %438 = arith.negf %437 : vector<2x32xf32>
    %439 = math.exp %438 : vector<2x32xf32>
    %cst_94 = arith.constant 1.000000e+00 : f32
    %440 = vector.broadcast %cst_94 : f32 to vector<2x32xf32>
    %441 = arith.addf %440, %439 : vector<2x32xf32>
    %442 = arith.divf %440, %441 : vector<2x32xf32>
    %443 = vector.broadcast %341 : vector<1x32xf32> to vector<2x32xf32>
    %444 = arith.mulf %442, %443 : vector<2x32xf32>
    %cst_95 = arith.constant dense<0.000000e+00> : vector<2xf32>
    %445 = vector.multi_reduction <add>, %444, %cst_95 [1] : vector<2x32xf32> to vector<2xf32>
    %446 = vector.shape_cast %445 : vector<2xf32> to vector<2x1xf32>
    %447 = vector.extract_strided_slice %333 {offsets = [10, 0], sizes = [2, 32], strides = [1, 1]} : vector<16x32xf32> to vector<2x32xf32>
    %448 = vector.broadcast %446 : vector<2x1xf32> to vector<2x32xf32>
    %449 = arith.mulf %448, %447 : vector<2x32xf32>
    %450 = arith.addf %432, %449 : vector<2x32xf32>
    %451 = vector.extract_strided_slice %336 {offsets = [12, 0], sizes = [2, 32], strides = [1, 1]} : vector<16x32xf32> to vector<2x32xf32>
    %452 = vector.extract_strided_slice %340 {offsets = [12, 0], sizes = [2, 1], strides = [1, 1]} : vector<16x1xf32> to vector<2x1xf32>
    %453 = vector.broadcast %452 : vector<2x1xf32> to vector<2x32xf32>
    %454 = arith.mulf %453, %339 : vector<2x32xf32>
    %455 = arith.addf %451, %454 : vector<2x32xf32>
    %456 = arith.negf %455 : vector<2x32xf32>
    %457 = math.exp %456 : vector<2x32xf32>
    %cst_96 = arith.constant 1.000000e+00 : f32
    %458 = vector.broadcast %cst_96 : f32 to vector<2x32xf32>
    %459 = arith.addf %458, %457 : vector<2x32xf32>
    %460 = arith.divf %458, %459 : vector<2x32xf32>
    %461 = vector.broadcast %341 : vector<1x32xf32> to vector<2x32xf32>
    %462 = arith.mulf %460, %461 : vector<2x32xf32>
    %cst_97 = arith.constant dense<0.000000e+00> : vector<2xf32>
    %463 = vector.multi_reduction <add>, %462, %cst_97 [1] : vector<2x32xf32> to vector<2xf32>
    %464 = vector.shape_cast %463 : vector<2xf32> to vector<2x1xf32>
    %465 = vector.extract_strided_slice %333 {offsets = [12, 0], sizes = [2, 32], strides = [1, 1]} : vector<16x32xf32> to vector<2x32xf32>
    %466 = vector.broadcast %464 : vector<2x1xf32> to vector<2x32xf32>
    %467 = arith.mulf %466, %465 : vector<2x32xf32>
    %468 = arith.addf %450, %467 : vector<2x32xf32>
    %469 = vector.extract_strided_slice %336 {offsets = [14, 0], sizes = [2, 32], strides = [1, 1]} : vector<16x32xf32> to vector<2x32xf32>
    %470 = vector.extract_strided_slice %340 {offsets = [14, 0], sizes = [2, 1], strides = [1, 1]} : vector<16x1xf32> to vector<2x1xf32>
    %471 = vector.broadcast %470 : vector<2x1xf32> to vector<2x32xf32>
    %472 = arith.mulf %471, %339 : vector<2x32xf32>
    %473 = arith.addf %469, %472 : vector<2x32xf32>
    %474 = arith.negf %473 : vector<2x32xf32>
    %475 = math.exp %474 : vector<2x32xf32>
    %cst_98 = arith.constant 1.000000e+00 : f32
    %476 = vector.broadcast %cst_98 : f32 to vector<2x32xf32>
    %477 = arith.addf %476, %475 : vector<2x32xf32>
    %478 = arith.divf %476, %477 : vector<2x32xf32>
    %479 = vector.broadcast %341 : vector<1x32xf32> to vector<2x32xf32>
    %480 = arith.mulf %478, %479 : vector<2x32xf32>
    %cst_99 = arith.constant dense<0.000000e+00> : vector<2xf32>
    %481 = vector.multi_reduction <add>, %480, %cst_99 [1] : vector<2x32xf32> to vector<2xf32>
    %482 = vector.shape_cast %481 : vector<2xf32> to vector<2x1xf32>
    %483 = vector.extract_strided_slice %333 {offsets = [14, 0], sizes = [2, 32], strides = [1, 1]} : vector<16x32xf32> to vector<2x32xf32>
    %484 = vector.broadcast %482 : vector<2x1xf32> to vector<2x32xf32>
    %485 = arith.mulf %484, %483 : vector<2x32xf32>
    %486 = arith.addf %468, %485 : vector<2x32xf32>
    %c0_100 = arith.constant 0 : index
    %c0_101 = arith.constant 0 : index
    %487 = vector.load %arg8[%c0_100, %c0_101] : memref<2x64xf32, #tpu.memory_space<vmem>>, vector<2x32xf32>
    tpu.vector_store %arg8[%c0_100, %c0_101], %486 {strides = array<i32>} : memref<2x64xf32, #tpu.memory_space<vmem>>, vector<2x32xf32>,
    %c0_102 = arith.constant 0 : index
    %c32 = arith.constant 32 : index
    %488 = vector.load %arg8[%c0_102, %c32] : memref<2x64xf32, #tpu.memory_space<vmem>>, vector<2x32xf32>
    tpu.vector_store %arg8[%c0_102, %c32], %329 {strides = array<i32>} : memref<2x64xf32, #tpu.memory_space<vmem>>, vector<2x32xf32>,
    return
  }
}

</mosaic_0001>

<llo_original>
// kernel: tpu_custom_call.1
$region0: #{tpu_custom_call.1}
  #allocation0 [shape = 'u32[]', space=smem, size = 0x4, offset = 0x4, fixed_abs, tag = 'smem constant byte address 0x4 - core index']
  #allocation1 [shape = 'u32[144,128]{1,0:T(1,128)}', space=vmem, size = 0x12000, scoped, tag = 'internal scratch']
  #allocation2 [shape = 'f32[16,32]{1,0:T(8,128)}', space=vmem, size = 0x2000, scoped, tag = 'scratch operand']
  %s0 = inlined_call_operand.hbm [shape: bf16[16,32], index: 0, kind: input, shape index: {}]
  %s1 = inlined_call_operand.vmem [shape: f32[16,1], index: 1, kind: input, shape index: {}]
  %s2 = inlined_call_operand.vmem [shape: f32[16,1], index: 2, kind: input, shape index: {}]
  %s3 = inlined_call_operand.vmem [shape: bf16[32,96], index: 3, kind: input, shape index: {}]
  %s4 = inlined_call_operand.vmem [shape: bf16[32,96], index: 4, kind: input, shape index: {}]
  %s5 = inlined_call_operand.vmem [shape: bf16[32,32], index: 5, kind: input, shape index: {}]
  %s6 = inlined_call_operand.hbm [shape: bf16[32,32], index: 6, kind: input, shape index: {}]
  %s7 = inlined_call_operand.vmem [shape: f32[1,32], index: 7, kind: input, shape index: {}]
  %s8 = inlined_call_operand.hbm [shape: f32[2,64], index: 8, kind: output, shape index: {}]
  %s9 = sld [smem:[#allocation0]]
  $region50: #{tpu_custom_call.1} parent=0
    _
  %s11 = ssub.s32 1, %s9
  %s12 = scalar_select 0, %s11, %s9
  $region1: #{tpu_custom_call.1} parent=0
    #allocation3 [shape = 'u8[4096]{0}', space=vmem, size = 0x1000, scoped, tag = 'input window, operand 0, single buffered']
    #allocation4 [shape = 's32[1]{0}', space=sflag, size = 0x4, scoped, tag = 'scoped memory for tpu_custom_call.1']
    #allocation5 [shape = 's32[1]{0}', space=sflag, size = 0x4, scoped, tag = 'scoped memory for tpu_custom_call.1']
    #allocation6 [shape = 'u8[8192]{0}', space=vmem, size = 0x2000, scoped, tag = 'input window, operand 6, single buffered']
    #allocation7 [shape = 's32[1]{0}', space=sflag, size = 0x4, scoped, tag = 'scoped memory for tpu_custom_call.1']
    #allocation8 [shape = 'u8[1024]{0}', space=vmem, size = 0x400, scoped, tag = 'output window, operand 0, single buffered']
    %13 = vsyncpa [#allocation4], 0
    %14 = vsyncpa [#allocation7], 0
    %15 = vsyncpa [#allocation5], 0
    // Predicated region
    $region2: #{tpu_custom_call.1} parent=1 // pred_check
      _
    $region3: #{tpu_custom_call.1} parent=1 // pred_check_branch
      %17 = sbr.rel (0) target = $region5
    $region4: #{tpu_custom_call.1} parent=1 // pred_region
      %s19 = ssub.s32 128, 128
      %20 = vsyncadd [#allocation4], %s19
      %s21 = sshll.u32 [#allocation3], 4
      %s22 = int_to_ptr.vmem [resolvable:$true] %s21
      %27 = dma.hbm_to_vmem [thread:$0]  %s0, 128, %s22, [#allocation4], 64, 64, 4
    $region5: #{tpu_custom_call.1} parent=1 // pred_fallthru
      _
    // Predicated region
    $region6: #{tpu_custom_call.1} parent=1 // pred_check
      _
    $region7: #{tpu_custom_call.1} parent=1 // pred_check_branch
      %29 = sbr.rel (0) target = $region9
    $region8: #{tpu_custom_call.1} parent=1 // pred_region
      _
    $region9: #{tpu_custom_call.1} parent=1 // pred_fallthru
      _
    // Predicated region
    $region10: #{tpu_custom_call.1} parent=1 // pred_check
      _
    $region11: #{tpu_custom_call.1} parent=1 // pred_check_branch
      %31 = sbr.rel (0) target = $region13
    $region12: #{tpu_custom_call.1} parent=1 // pred_region
      _
    $region13: #{tpu_custom_call.1} parent=1 // pred_fallthru
      _
    // Predicated region
    $region14: #{tpu_custom_call.1} parent=1 // pred_check
      _
    $region15: #{tpu_custom_call.1} parent=1 // pred_check_branch
      %33 = sbr.rel (0) target = $region17
    $region16: #{tpu_custom_call.1} parent=1 // pred_region
      _
    $region17: #{tpu_custom_call.1} parent=1 // pred_fallthru
      _
    // Predicated region
    $region18: #{tpu_custom_call.1} parent=1 // pred_check
      _
    $region19: #{tpu_custom_call.1} parent=1 // pred_check_branch
      %35 = sbr.rel (0) target = $region21
    $region20: #{tpu_custom_call.1} parent=1 // pred_region
      _
    $region21: #{tpu_custom_call.1} parent=1 // pred_fallthru
      _
    // Predicated region
    $region22: #{tpu_custom_call.1} parent=1 // pred_check
      _
    $region23: #{tpu_custom_call.1} parent=1 // pred_check_branch
      %37 = sbr.rel (0) target = $region25
    $region24: #{tpu_custom_call.1} parent=1 // pred_region
      _
    $region25: #{tpu_custom_call.1} parent=1 // pred_fallthru
      _
    // Predicated region
    $region26: #{tpu_custom_call.1} parent=1 // pred_check
      _
    $region27: #{tpu_custom_call.1} parent=1 // pred_check_branch
      %39 = sbr.rel (0) target = $region29
    $region28: #{tpu_custom_call.1} parent=1 // pred_region
      %s41 = ssub.s32 256, 256
      %42 = vsyncadd [#allocation7], %s41
      %s43 = sshll.u32 [#allocation6], 4
      %s44 = int_to_ptr.vmem [resolvable:$true] %s43
      %49 = dma.hbm_to_vmem [thread:$0]  %s6, 256, %s44, [#allocation7], 64, 64, 4
    $region29: #{tpu_custom_call.1} parent=1 // pred_fallthru
      _
    // Predicated region
    $region30: #{tpu_custom_call.1} parent=1 // pred_check
      _
    $region31: #{tpu_custom_call.1} parent=1 // pred_check_branch
      %51 = sbr.rel (0) target = $region33
    $region32: #{tpu_custom_call.1} parent=1 // pred_region
      _
    $region33: #{tpu_custom_call.1} parent=1 // pred_fallthru
      _
    // Predicated region
    $region34: #{tpu_custom_call.1} parent=1 // pred_check
      _
    $region35: #{tpu_custom_call.1} parent=1 // pred_check_branch
      %53 = sbr.rel (0) target = $region37
    $region36: #{tpu_custom_call.1} parent=1 // pred_region
      %54 = dma.done [#allocation4], 128
    $region37: #{tpu_custom_call.1} parent=1 // pred_fallthru
      _
    // Predicated region
    $region38: #{tpu_custom_call.1} parent=1 // pred_check
      _
    $region39: #{tpu_custom_call.1} parent=1 // pred_check_branch
      %56 = sbr.rel (0) target = $region41
    $region40: #{tpu_custom_call.1} parent=1 // pred_region
      %57 = dma.done [#allocation7], 256
    $region41: #{tpu_custom_call.1} parent=1 // pred_fallthru
      _
    %v59 = vld [vmem:[#allocation3] sm:$0xf]
    %v60 = vld [vmem:[#allocation3 + $0x4] sm:$0xf]
    %v61 = vld [vmem:[%s3] sm:$0xf]
    %v62 = vld [vmem:[%s3 + $0x4] sm:$0xf]
    %v63 = vld [vmem:[%s3 + $0x8] sm:$0xf]
    %v64 = vld [vmem:[%s3 + $0xc] sm:$0xf]
    %v67 = vunpack.c.l.b16 %v59
    %v68 = vunpack.c.l.b16 %v60
    %v69 = vpack.c.b16 %v68, %v67
    %v74 = vunpack.c.l.b16 %v61
    %v75 = vunpack.c.l.b16 %v62
    %v76 = vunpack.c.l.b16 %v63
    %v77 = vunpack.c.l.b16 %v64
    %v78 = vpack.c.b16 %v75, %v74
    %v79 = vpack.c.b16 %v77, %v76
    %vm82 = vcmask 261120
    %v84 = vsel %vm82, %v69, 0
    %86 = vmatprep.subr.bf16.mxu0 0
    %87 = vmatpush1.bf16.msra.mxu0 %v78
    %88 = vmatprep.subr.bf16.mxu0 0
    %89 = vmatpush1.bf16.msra.mxu0 %v79
    %90 = vmatprep.subr.bf16.mxu0 0
    %91 = vmatpush1.bf16.msra.mxu0 0
    %92 = vmatprep.subr.bf16.mxu0 0
    %93 = vmatpush1.bf16.msra.mxu0 0
    %94 = vmatprep.subr.bf16.mxu0 0
    %95 = vmatpush1.bf16.msra.mxu0 0
    %96 = vmatprep.subr.bf16.mxu0 0
    %97 = vmatpush1.bf16.msra.mxu0 0
    %98 = vmatprep.subr.bf16.mxu0 0
    %99 = vmatpush1.bf16.msra.mxu0 0
    %100 = vmatprep.subr.bf16.mxu0 0
    %101 = vmatpush1.bf16.msra.mxu0 0
    %102 = vmatprep.subr.bf16.mxu0 0
    %103 = vmatpush1.bf16.msra.mxu0 0
    %104 = vmatprep.subr.bf16.mxu0 0
    %105 = vmatpush1.bf16.msra.mxu0 0
    %106 = vmatprep.subr.bf16.mxu0 0
    %107 = vmatpush1.bf16.msra.mxu0 0
    %108 = vmatprep.subr.bf16.mxu0 0
    %109 = vmatpush1.bf16.msra.mxu0 0
    %110 = vmatprep.subr.bf16.mxu0 0
    %111 = vmatpush1.bf16.msra.mxu0 0
    %112 = vmatprep.subr.bf16.mxu0 0
    %113 = vmatpush1.bf16.msra.mxu0 0
    %114 = vmatprep.subr.bf16.mxu0 0
    %115 = vmatpush1.bf16.msra.mxu0 0
    %116 = vmatprep.subr.bf16.mxu0 0
    %117 = vmatpush1.bf16.msra.mxu0 0
    %118 = vmatprep.mubr.bf16.mxu0 0
    %119 = vmatmul.mubr.bf16.gmra.mrb[0].mxu0 %v84
    %v120 = vpop.f32.mrb[0].mxu0
    %v121 = vadd.f32 0.0, %v120
    %v122 = vpop.f32.mrb[0].mxu0
    %v123 = vpop.f32.mrb[0].mxu0
    %v124 = vadd.f32 0.0, %v123
    %v125 = vpop.f32.mrb[0].mxu0
    %126 = vdwg.mxu0
    %v127 = vld [vmem:[%s1] sm:$0xff]
    %v128 = vld [vmem:[%s1 + $0x8] sm:$0xff]
    %v129 = vld [vmem:[%s4] sm:$0xf]
    %v130 = vld [vmem:[%s4 + $0x4] sm:$0xf]
    %v131 = vld [vmem:[%s4 + $0x8] sm:$0xf]
    %v132 = vld [vmem:[%s4 + $0xc] sm:$0xf]
    %v137 = vunpack.c.l.b16 %v129
    %v138 = vunpack.c.l.b16 %v130
    %v139 = vunpack.c.l.b16 %v131
    %v140 = vunpack.c.l.b16 %v132
    %v141 = vpack.c.b16 %v138, %v137
    %v142 = vpack.c.b16 %v140, %v139
    %v146 = vsel %vm82, 0, 0
    %148 = vmatprep.subr.bf16.mxu0 0
    %149 = vmatpush1.bf16.msra.mxu0 %v141
    %150 = vmatprep.subr.bf16.mxu0 0
    %151 = vmatpush1.bf16.msra.mxu0 %v142
    %152 = vmatprep.subr.bf16.mxu0 0
    %153 = vmatpush1.bf16.msra.mxu0 0
    %154 = vmatprep.subr.bf16.mxu0 0
    %155 = vmatpush1.bf16.msra.mxu0 0
    %156 = vmatprep.subr.bf16.mxu0 0
    %157 = vmatpush1.bf16.msra.mxu0 0
    %158 = vmatprep.subr.bf16.mxu0 0
    %159 = vmatpush1.bf16.msra.mxu0 0
    %160 = vmatprep.subr.bf16.mxu0 0
    %161 = vmatpush1.bf16.msra.mxu0 0
    %162 = vmatprep.subr.bf16.mxu0 0
    %163 = vmatpush1.bf16.msra.mxu0 0
    %164 = vmatprep.subr.bf16.mxu0 0
    %165 = vmatpush1.bf16.msra.mxu0 0
    %166 = vmatprep.subr.bf16.mxu0 0
    %167 = vmatpush1.bf16.msra.mxu0 0
    %168 = vmatprep.subr.bf16.mxu0 0
    %169 = vmatpush1.bf16.msra.mxu0 0
    %170 = vmatprep.subr.bf16.mxu0 0
    %171 = vmatpush1.bf16.msra.mxu0 0
    %172 = vmatprep.subr.bf16.mxu0 0
    %173 = vmatpush1.bf16.msra.mxu0 0
    %174 = vmatprep.subr.bf16.mxu0 0
    %175 = vmatpush1.bf16.msra.mxu0 0
    %176 = vmatprep.subr.bf16.mxu0 0
    %177 = vmatpush1.bf16.msra.mxu0 0
    %178 = vmatprep.subr.bf16.mxu0 0
    %179 = vmatpush1.bf16.msra.mxu0 0
    %180 = vmatprep.mubr.bf16.mxu0 0
    %181 = vmatmul.mubr.bf16.gmra.mrb[0].mxu0 %v146
    %v182 = vpop.f32.mrb[0].mxu0
    %v183 = vadd.f32 0.0, %v182
    %v184 = vpop.f32.mrb[0].mxu0
    %v185 = vpop.f32.mrb[0].mxu0
    %v186 = vpop.f32.mrb[0].mxu0
    %187 = vdwg.mxu0
    %v188 = vadd.f32 %v121, %v183
    %v189 = vxor.u32 %v188, 2147483648
    %v190 = vmul.f32 %v189, 1.442695
    %v191 = vpow.pop %v190
    %v192 = vadd.f32 %v191, 1.0
    %v193 = vrcp.pop %v192
    %v194 = vmul.f32 1.0, %v193
    %196 = vrot.lane.b32.xlu0 %v183, 64
    %v197 = vpop.permute.xlu0 %196
    %v199 = vmul.f32 %v194, %v197
    %201 = vrot.lane.b32.xlu0 %v199, 64
    %v202 = vpop.permute.xlu0 %201
    %v204 = vadd.f32 %v121, %v202
    %v205 = vtanh.pop %v204
    %v206 = vsub.f32 1.0, %v194
    %208 = vrot.lane.b32.xlu0 %v205, 96
    %v209 = vpop.permute.xlu0 %208
    %v211 = vmul.f32 %v206, %v209
    %v212 = vmul.f32 %v194, 0.0
    %v213 = vadd.f32 %v211, %v212
    %215 = vset.pattern.permute.xlu0 0
    %216 = vperm.xlu0 %215, %v127
    %v217 = vpop.permute.xlu0 %216
    %v219 = vmul.f32 %v217, %v213
    %v220 = vsub.f32 1.0, %v127
    %222 = vset.pattern.permute.xlu0 0
    %223 = vperm.xlu0 %222, %v220
    %v224 = vpop.permute.xlu0 %223
    %v226 = vmul.f32 %v224, 0.0
    %v227 = vadd.f32 %v219, %v226
    %v228 = vmul.f32 %v227, %v217
    %230 = vrot.lane.b32.xlu0 %v228, 96
    %v231 = vpop.permute.xlu0 %230
    %vm233 = vcmask 254976
    %234 = vst.msk [vmem:[#allocation2] sm:$0x3] %vm233, %v231
    %v235 = vpack.c.bf16 %v227, %v227
    %v236 = vld [vmem:[%s4] sm:$0xf]
    %v237 = vld [vmem:[%s4 + $0x4] sm:$0xf]
    %v238 = vld [vmem:[%s4 + $0x8] sm:$0xf]
    %v239 = vld [vmem:[%s4 + $0xc] sm:$0xf]
    %241 = vrot.lane.b32.xlu0 %v235, 96
    %v242 = vpop.permute.xlu0 %241
    %v247 = vunpack.c.l.b16 %v236
    %v248 = vunpack.c.l.b16 %v237
    %v249 = vunpack.c.l.b16 %v238
    %v250 = vunpack.c.l.b16 %v239
    %v251 = vpack.c.b16 %v248, %v247
    %v252 = vpack.c.b16 %v250, %v249
    %v256 = vsel %vm82, %v242, 0
    %258 = vmatprep.subr.bf16.mxu0 0
    %259 = vmatpush1.bf16.msra.mxu0 %v251
    %260 = vmatprep.subr.bf16.mxu0 0
    %261 = vmatpush1.bf16.msra.mxu0 %v252
    %262 = vmatprep.subr.bf16.mxu0 0
    %263 = vmatpush1.bf16.msra.mxu0 0
    %264 = vmatprep.subr.bf16.mxu0 0
    %265 = vmatpush1.bf16.msra.mxu0 0
    %266 = vmatprep.subr.bf16.mxu0 0
    %267 = vmatpush1.bf16.msra.mxu0 0
    %268 = vmatprep.subr.bf16.mxu0 0
    %269 = vmatpush1.bf16.msra.mxu0 0
    %270 = vmatprep.subr.bf16.mxu0 0
    %271 = vmatpush1.bf16.msra.mxu0 0
    %272 = vmatprep.subr.bf16.mxu0 0
    %273 = vmatpush1.bf16.msra.mxu0 0
    %274 = vmatprep.subr.bf16.mxu0 0
    %275 = vmatpush1.bf16.msra.mxu0 0
    %276 = vmatprep.subr.bf16.mxu0 0
    %277 = vmatpush1.bf16.msra.mxu0 0
    %278 = vmatprep.subr.bf16.mxu0 0
    %279 = vmatpush1.bf16.msra.mxu0 0
    %280 = vmatprep.subr.bf16.mxu0 0
    %281 = vmatpush1.bf16.msra.mxu0 0
    %282 = vmatprep.subr.bf16.mxu0 0
    %283 = vmatpush1.bf16.msra.mxu0 0
    %284 = vmatprep.subr.bf16.mxu0 0
    %285 = vmatpush1.bf16.msra.mxu0 0
    %286 = vmatprep.subr.bf16.mxu0 0
    %287 = vmatpush1.bf16.msra.mxu0 0
    %288 = vmatprep.subr.bf16.mxu0 0
    %289 = vmatpush1.bf16.msra.mxu0 0
    %290 = vmatprep.mubr.bf16.mxu0 0
    %291 = vmatmul.mubr.bf16.gmra.mrb[0].mxu0 %v256
    %v292 = vpop.f32.mrb[0].mxu0
    %v293 = vadd.f32 0.0, %v292
    %v294 = vpop.f32.mrb[0].mxu0
    %v295 = vpop.f32.mrb[0].mxu0
    %v296 = vpop.f32.mrb[0].mxu0
    %297 = vdwg.mxu0
    %v299 = vrot.slane %v293, 6
    %v301 = vadd.f32 %v121, %v299
    %v302 = vxor.u32 %v301, 2147483648
    %v303 = vmul.f32 %v302, 1.442695
    %v304 = vpow.pop %v303
    %v305 = vadd.f32 %v304, 1.0
    %v306 = vrcp.pop %v305
    %v307 = vmul.f32 1.0, %v306
    %308 = vrot.lane.b32.xlu0 %v299, 64
    %v309 = vpop.permute.xlu0 %308
    %v311 = vmul.f32 %v307, %v309
    %313 = vrot.lane.b32.xlu0 %v311, 64
    %v314 = vpop.permute.xlu0 %313
    %v316 = vadd.f32 %v121, %v314
    %v317 = vtanh.pop %v316
    %v318 = vsub.f32 1.0, %v307
    %320 = vrot.lane.b32.xlu0 %v317, 96
    %v321 = vpop.permute.xlu0 %320
    %v323 = vmul.f32 %v318, %v321
    %v325 = vrot.slane %v227, 6
    %v327 = vmul.f32 %v307, %v325
    %v328 = vadd.f32 %v323, %v327
    %v329 = vmul.f32 %v217, %v328
    %330 = vrot.lane.b32.xlu0 %v325, 96
    %v331 = vpop.permute.xlu0 %330
    %v333 = vmul.f32 %v224, %v331
    %335 = vrot.lane.b32.xlu0 %v333, 32
    %v336 = vpop.permute.xlu0 %335
    %v338 = vadd.f32 %v329, %v336
    %v339 = vmul.f32 %v338, %v217
    %341 = vrot.lane.b32.xlu0 %v339, 96
    %v342 = vpop.permute.xlu0 %341
    %vm344 = vcmask 257026
    %345 = vst.msk [vmem:[#allocation2] sm:$0xc] %vm344, %v342
    %v346 = vpack.c.bf16 %v338, %v338
    %v347 = vld [vmem:[%s4] sm:$0xf]
    %v348 = vld [vmem:[%s4 + $0x4] sm:$0xf]
    %v349 = vld [vmem:[%s4 + $0x8] sm:$0xf]
    %v350 = vld [vmem:[%s4 + $0xc] sm:$0xf]
    %v352 = vrot.slane %v346, 1
    %353 = vrot.lane.b32.xlu0 %v352, 96
    %v354 = vpop.permute.xlu0 %353
    %v359 = vunpack.c.l.b16 %v347
    %v360 = vunpack.c.l.b16 %v348
    %v361 = vunpack.c.l.b16 %v349
    %v362 = vunpack.c.l.b16 %v350
    %v363 = vpack.c.b16 %v360, %v359
    %v364 = vpack.c.b16 %v362, %v361
    %v368 = vsel %vm82, %v354, 0
    %370 = vmatprep.subr.bf16.mxu0 0
    %371 = vmatpush1.bf16.msra.mxu0 %v363
    %372 = vmatprep.subr.bf16.mxu0 0
    %373 = vmatpush1.bf16.msra.mxu0 %v364
    %374 = vmatprep.subr.bf16.mxu0 0
    %375 = vmatpush1.bf16.msra.mxu0 0
    %376 = vmatprep.subr.bf16.mxu0 0
    %377 = vmatpush1.bf16.msra.mxu0 0
    %378 = vmatprep.subr.bf16.mxu0 0
    %379 = vmatpush1.bf16.msra.mxu0 0
    %380 = vmatprep.subr.bf16.mxu0 0
    %381 = vmatpush1.bf16.msra.mxu0 0
    %382 = vmatprep.subr.bf16.mxu0 0
    %383 = vmatpush1.bf16.msra.mxu0 0
    %384 = vmatprep.subr.bf16.mxu0 0
    %385 = vmatpush1.bf16.msra.mxu0 0
    %386 = vmatprep.subr.bf16.mxu0 0
    %387 = vmatpush1.bf16.msra.mxu0 0
    %388 = vmatprep.subr.bf16.mxu0 0
    %389 = vmatpush1.bf16.msra.mxu0 0
    %390 = vmatprep.subr.bf16.mxu0 0
    %391 = vmatpush1.bf16.msra.mxu0 0
    %392 = vmatprep.subr.bf16.mxu0 0
    %393 = vmatpush1.bf16.msra.mxu0 0
    %394 = vmatprep.subr.bf16.mxu0 0
    %395 = vmatpush1.bf16.msra.mxu0 0
    %396 = vmatprep.subr.bf16.mxu0 0
    %397 = vmatpush1.bf16.msra.mxu0 0
    %398 = vmatprep.subr.bf16.mxu0 0
    %399 = vmatpush1.bf16.msra.mxu0 0
    %400 = vmatprep.subr.bf16.mxu0 0
    %401 = vmatpush1.bf16.msra.mxu0 0
    %402 = vmatprep.mubr.bf16.mxu0 0
    %403 = vmatmul.mubr.bf16.gmra.mrb[0].mxu0 %v368
    %v404 = vpop.f32.mrb[0].mxu0
    %v405 = vadd.f32 0.0, %v404
    %v406 = vpop.f32.mrb[0].mxu0
    %v407 = vpop.f32.mrb[0].mxu0
    %v408 = vpop.f32.mrb[0].mxu0
    %409 = vdwg.mxu0
    %v411 = vrot.slane %v405, 4
    %v413 = vadd.f32 %v121, %v411
    %v414 = vxor.u32 %v413, 2147483648
    %v415 = vmul.f32 %v414, 1.442695
    %v416 = vpow.pop %v415
    %v417 = vadd.f32 %v416, 1.0
    %v418 = vrcp.pop %v417
    %v419 = vmul.f32 1.0, %v418
    %420 = vrot.lane.b32.xlu0 %v411, 64
    %v421 = vpop.permute.xlu0 %420
    %v423 = vmul.f32 %v419, %v421
    %425 = vrot.lane.b32.xlu0 %v423, 64
    %v426 = vpop.permute.xlu0 %425
    %v428 = vadd.f32 %v121, %v426
    %v429 = vtanh.pop %v428
    %v430 = vsub.f32 1.0, %v419
    %432 = vrot.lane.b32.xlu0 %v429, 96
    %v433 = vpop.permute.xlu0 %432
    %v435 = vmul.f32 %v430, %v433
    %v437 = vrot.slane %v338, 6
    %v439 = vmul.f32 %v419, %v437
    %v440 = vadd.f32 %v435, %v439
    %v441 = vmul.f32 %v217, %v440
    %442 = vrot.lane.b32.xlu0 %v437, 96
    %v443 = vpop.permute.xlu0 %442
    %v445 = vmul.f32 %v224, %v443
    %447 = vrot.lane.b32.xlu0 %v445, 32
    %v448 = vpop.permute.xlu0 %447
    %v450 = vadd.f32 %v441, %v448
    %v451 = vmul.f32 %v450, %v217
    %453 = vrot.lane.b32.xlu0 %v451, 96
    %v454 = vpop.permute.xlu0 %453
    %vm456 = vcmask 259076
    %457 = vst.msk [vmem:[#allocation2] sm:$0x30] %vm456, %v454
    %v458 = vpack.c.bf16 %v450, %v450
    %v459 = vld [vmem:[%s4] sm:$0xf]
    %v460 = vld [vmem:[%s4 + $0x4] sm:$0xf]
    %v461 = vld [vmem:[%s4 + $0x8] sm:$0xf]
    %v462 = vld [vmem:[%s4 + $0xc] sm:$0xf]
    %v464 = vrot.slane %v458, 2
    %465 = vrot.lane.b32.xlu0 %v464, 96
    %v466 = vpop.permute.xlu0 %465
    %v471 = vunpack.c.l.b16 %v459
    %v472 = vunpack.c.l.b16 %v460
    %v473 = vunpack.c.l.b16 %v461
    %v474 = vunpack.c.l.b16 %v462
    %v475 = vpack.c.b16 %v472, %v471
    %v476 = vpack.c.b16 %v474, %v473
    %v480 = vsel %vm82, %v466, 0
    %482 = vmatprep.subr.bf16.mxu0 0
    %483 = vmatpush1.bf16.msra.mxu0 %v475
    %484 = vmatprep.subr.bf16.mxu0 0
    %485 = vmatpush1.bf16.msra.mxu0 %v476
    %486 = vmatprep.subr.bf16.mxu0 0
    %487 = vmatpush1.bf16.msra.mxu0 0
    %488 = vmatprep.subr.bf16.mxu0 0
    %489 = vmatpush1.bf16.msra.mxu0 0
    %490 = vmatprep.subr.bf16.mxu0 0
    %491 = vmatpush1.bf16.msra.mxu0 0
    %492 = vmatprep.subr.bf16.mxu0 0
    %493 = vmatpush1.bf16.msra.mxu0 0
    %494 = vmatprep.subr.bf16.mxu0 0
    %495 = vmatpush1.bf16.msra.mxu0 0
    %496 = vmatprep.subr.bf16.mxu0 0
    %497 = vmatpush1.bf16.msra.mxu0 0
    %498 = vmatprep.subr.bf16.mxu0 0
    %499 = vmatpush1.bf16.msra.mxu0 0
    %500 = vmatprep.subr.bf16.mxu0 0
    %501 = vmatpush1.bf16.msra.mxu0 0
    %502 = vmatprep.subr.bf16.mxu0 0
    %503 = vmatpush1.bf16.msra.mxu0 0
    %504 = vmatprep.subr.bf16.mxu0 0
    %505 = vmatpush1.bf16.msra.mxu0 0
    %506 = vmatprep.subr.bf16.mxu0 0
    %507 = vmatpush1.bf16.msra.mxu0 0
    %508 = vmatprep.subr.bf16.mxu0 0
    %509 = vmatpush1.bf16.msra.mxu0 0
    %510 = vmatprep.subr.bf16.mxu0 0
    %511 = vmatpush1.bf16.msra.mxu0 0
    %512 = vmatprep.subr.bf16.mxu0 0
    %513 = vmatpush1.bf16.msra.mxu0 0
    %514 = vmatprep.mubr.bf16.mxu0 0
    %515 = vmatmul.mubr.bf16.gmra.mrb[0].mxu0 %v480
    %v516 = vpop.f32.mrb[0].mxu0
    %v517 = vadd.f32 0.0, %v516
    %v518 = vpop.f32.mrb[0].mxu0
    %v519 = vpop.f32.mrb[0].mxu0
    %v520 = vpop.f32.mrb[0].mxu0
    %521 = vdwg.mxu0
    %v523 = vrot.slane %v517, 2
    %v525 = vadd.f32 %v121, %v523
    %v526 = vxor.u32 %v525, 2147483648
    %v527 = vmul.f32 %v526, 1.442695
    %v528 = vpow.pop %v527
    %v529 = vadd.f32 %v528, 1.0
    %v530 = vrcp.pop %v529
    %v531 = vmul.f32 1.0, %v530
    %532 = vrot.lane.b32.xlu0 %v523, 64
    %v533 = vpop.permute.xlu0 %532
    %v535 = vmul.f32 %v531, %v533
    %537 = vrot.lane.b32.xlu0 %v535, 64
    %v538 = vpop.permute.xlu0 %537
    %v540 = vadd.f32 %v121, %v538
    %v541 = vtanh.pop %v540
    %v542 = vsub.f32 1.0, %v531
    %544 = vrot.lane.b32.xlu0 %v541, 96
    %v545 = vpop.permute.xlu0 %544
    %v547 = vmul.f32 %v542, %v545
    %v549 = vrot.slane %v450, 6
    %v551 = vmul.f32 %v531, %v549
    %v552 = vadd.f32 %v547, %v551
    %v553 = vmul.f32 %v217, %v552
    %554 = vrot.lane.b32.xlu0 %v549, 96
    %v555 = vpop.permute.xlu0 %554
    %v557 = vmul.f32 %v224, %v555
    %559 = vrot.lane.b32.xlu0 %v557, 32
    %v560 = vpop.permute.xlu0 %559
    %v562 = vadd.f32 %v553, %v560
    %v563 = vmul.f32 %v562, %v217
    %565 = vrot.lane.b32.xlu0 %v563, 96
    %v566 = vpop.permute.xlu0 %565
    %vm568 = vcmask 261126
    %569 = vst.msk [vmem:[#allocation2] sm:$0xc0] %vm568, %v566
    %v570 = vpack.c.bf16 %v562, %v562
    %v571 = vld [vmem:[%s4] sm:$0xf]
    %v572 = vld [vmem:[%s4 + $0x4] sm:$0xf]
    %v573 = vld [vmem:[%s4 + $0x8] sm:$0xf]
    %v574 = vld [vmem:[%s4 + $0xc] sm:$0xf]
    %v576 = vrot.slane %v570, 3
    %577 = vrot.lane.b32.xlu0 %v576, 96
    %v578 = vpop.permute.xlu0 %577
    %v583 = vunpack.c.l.b16 %v571
    %v584 = vunpack.c.l.b16 %v572
    %v585 = vunpack.c.l.b16 %v573
    %v586 = vunpack.c.l.b16 %v574
    %v587 = vpack.c.b16 %v584, %v583
    %v588 = vpack.c.b16 %v586, %v585
    %v592 = vsel %vm82, %v578, 0
    %594 = vmatprep.subr.bf16.mxu0 0
    %595 = vmatpush1.bf16.msra.mxu0 %v587
    %596 = vmatprep.subr.bf16.mxu0 0
    %597 = vmatpush1.bf16.msra.mxu0 %v588
    %598 = vmatprep.subr.bf16.mxu0 0
    %599 = vmatpush1.bf16.msra.mxu0 0
    %600 = vmatprep.subr.bf16.mxu0 0
    %601 = vmatpush1.bf16.msra.mxu0 0
    %602 = vmatprep.subr.bf16.mxu0 0
    %603 = vmatpush1.bf16.msra.mxu0 0
    %604 = vmatprep.subr.bf16.mxu0 0
    %605 = vmatpush1.bf16.msra.mxu0 0
    %606 = vmatprep.subr.bf16.mxu0 0
    %607 = vmatpush1.bf16.msra.mxu0 0
    %608 = vmatprep.subr.bf16.mxu0 0
    %609 = vmatpush1.bf16.msra.mxu0 0
    %610 = vmatprep.subr.bf16.mxu0 0
    %611 = vmatpush1.bf16.msra.mxu0 0
    %612 = vmatprep.subr.bf16.mxu0 0
    %613 = vmatpush1.bf16.msra.mxu0 0
    %614 = vmatprep.subr.bf16.mxu0 0
    %615 = vmatpush1.bf16.msra.mxu0 0
    %616 = vmatprep.subr.bf16.mxu0 0
    %617 = vmatpush1.bf16.msra.mxu0 0
    %618 = vmatprep.subr.bf16.mxu0 0
    %619 = vmatpush1.bf16.msra.mxu0 0
    %620 = vmatprep.subr.bf16.mxu0 0
    %621 = vmatpush1.bf16.msra.mxu0 0
    %622 = vmatprep.subr.bf16.mxu0 0
    %623 = vmatpush1.bf16.msra.mxu0 0
    %624 = vmatprep.subr.bf16.mxu0 0
    %625 = vmatpush1.bf16.msra.mxu0 0
    %626 = vmatprep.mubr.bf16.mxu0 0
    %627 = vmatmul.mubr.bf16.gmra.mrb[0].mxu0 %v592
    %v628 = vpop.f32.mrb[0].mxu0
    %v629 = vadd.f32 0.0, %v628
    %v630 = vpop.f32.mrb[0].mxu0
    %v631 = vpop.f32.mrb[0].mxu0
    %v632 = vpop.f32.mrb[0].mxu0
    %633 = vdwg.mxu0
    %v634 = vadd.f32 %v124, %v629
    %v635 = vxor.u32 %v634, 2147483648
    %v636 = vmul.f32 %v635, 1.442695
    %v637 = vpow.pop %v636
    %v638 = vadd.f32 %v637, 1.0
    %v639 = vrcp.pop %v638
    %v640 = vmul.f32 1.0, %v639
    %642 = vrot.lane.b32.xlu0 %v629, 64
    %v643 = vpop.permute.xlu0 %642
    %v645 = vmul.f32 %v640, %v643
    %647 = vrot.lane.b32.xlu0 %v645, 64
    %v648 = vpop.permute.xlu0 %647
    %v650 = vadd.f32 %v124, %v648
    %v651 = vtanh.pop %v650
    %v652 = vsub.f32 1.0, %v640
    %654 = vrot.lane.b32.xlu0 %v651, 96
    %v655 = vpop.permute.xlu0 %654
    %v657 = vmul.f32 %v652, %v655
    %v659 = vrot.slane %v562, 6
    %v661 = vmul.f32 %v640, %v659
    %v662 = vadd.f32 %v657, %v661
    %664 = vset.pattern.permute.xlu0 0
    %665 = vperm.xlu0 %664, %v128
    %v666 = vpop.permute.xlu0 %665
    %v668 = vmul.f32 %v666, %v662
    %v669 = vsub.f32 1.0, %v128
    %671 = vset.pattern.permute.xlu0 0
    %672 = vperm.xlu0 %671, %v669
    %v673 = vpop.permute.xlu0 %672
    %675 = vrot.lane.b32.xlu0 %v659, 96
    %v676 = vpop.permute.xlu0 %675
    %v678 = vmul.f32 %v673, %v676
    %680 = vrot.lane.b32.xlu0 %v678, 32
    %v681 = vpop.permute.xlu0 %680
    %v683 = vadd.f32 %v668, %v681
    %v684 = vmul.f32 %v683, %v666
    %686 = vrot.lane.b32.xlu0 %v684, 96
    %v687 = vpop.permute.xlu0 %686
    %689 = vst.msk [vmem:[#allocation2 + $0x8] sm:$0x3] %vm233, %v687
    %v690 = vpack.c.bf16 %v683, %v683
    %v691 = vld [vmem:[%s4] sm:$0xf]
    %v692 = vld [vmem:[%s4 + $0x4] sm:$0xf]
    %v693 = vld [vmem:[%s4 + $0x8] sm:$0xf]
    %v694 = vld [vmem:[%s4 + $0xc] sm:$0xf]
    %696 = vrot.lane.b32.xlu0 %v690, 96
    %v697 = vpop.permute.xlu0 %696
    %v702 = vunpack.c.l.b16 %v691
    %v703 = vunpack.c.l.b16 %v692
    %v704 = vunpack.c.l.b16 %v693
    %v705 = vunpack.c.l.b16 %v694
    %v706 = vpack.c.b16 %v703, %v702
    %v707 = vpack.c.b16 %v705, %v704
    %v711 = vsel %vm82, %v697, 0
    %713 = vmatprep.subr.bf16.mxu0 0
    %714 = vmatpush1.bf16.msra.mxu0 %v706
    %715 = vmatprep.subr.bf16.mxu0 0
    %716 = vmatpush1.bf16.msra.mxu0 %v707
    %717 = vmatprep.subr.bf16.mxu0 0
    %718 = vmatpush1.bf16.msra.mxu0 0
    %719 = vmatprep.subr.bf16.mxu0 0
    %720 = vmatpush1.bf16.msra.mxu0 0
    %721 = vmatprep.subr.bf16.mxu0 0
    %722 = vmatpush1.bf16.msra.mxu0 0
    %723 = vmatprep.subr.bf16.mxu0 0
    %724 = vmatpush1.bf16.msra.mxu0 0
    %725 = vmatprep.subr.bf16.mxu0 0
    %726 = vmatpush1.bf16.msra.mxu0 0
    %727 = vmatprep.subr.bf16.mxu0 0
    %728 = vmatpush1.bf16.msra.mxu0 0
    %729 = vmatprep.subr.bf16.mxu0 0
    %730 = vmatpush1.bf16.msra.mxu0 0
    %731 = vmatprep.subr.bf16.mxu0 0
    %732 = vmatpush1.bf16.msra.mxu0 0
    %733 = vmatprep.subr.bf16.mxu0 0
    %734 = vmatpush1.bf16.msra.mxu0 0
    %735 = vmatprep.subr.bf16.mxu0 0
    %736 = vmatpush1.bf16.msra.mxu0 0
    %737 = vmatprep.subr.bf16.mxu0 0
    %738 = vmatpush1.bf16.msra.mxu0 0
    %739 = vmatprep.subr.bf16.mxu0 0
    %740 = vmatpush1.bf16.msra.mxu0 0
    %741 = vmatprep.subr.bf16.mxu0 0
    %742 = vmatpush1.bf16.msra.mxu0 0
    %743 = vmatprep.subr.bf16.mxu0 0
    %744 = vmatpush1.bf16.msra.mxu0 0
    %745 = vmatprep.mubr.bf16.mxu0 0
    %746 = vmatmul.mubr.bf16.gmra.mrb[0].mxu0 %v711
    %v747 = vpop.f32.mrb[0].mxu0
    %v748 = vadd.f32 0.0, %v747
    %v749 = vpop.f32.mrb[0].mxu0
    %v750 = vpop.f32.mrb[0].mxu0
    %v751 = vpop.f32.mrb[0].mxu0
    %752 = vdwg.mxu0
    %v754 = vrot.slane %v748, 6
    %v756 = vadd.f32 %v124, %v754
    %v757 = vxor.u32 %v756, 2147483648
    %v758 = vmul.f32 %v757, 1.442695
    %v759 = vpow.pop %v758
    %v760 = vadd.f32 %v759, 1.0
    %v761 = vrcp.pop %v760
    %v762 = vmul.f32 1.0, %v761
    %763 = vrot.lane.b32.xlu0 %v754, 64
    %v764 = vpop.permute.xlu0 %763
    %v766 = vmul.f32 %v762, %v764
    %768 = vrot.lane.b32.xlu0 %v766, 64
    %v769 = vpop.permute.xlu0 %768
    %v771 = vadd.f32 %v124, %v769
    %v772 = vtanh.pop %v771
    %v773 = vsub.f32 1.0, %v762
    %775 = vrot.lane.b32.xlu0 %v772, 96
    %v776 = vpop.permute.xlu0 %775
    %v778 = vmul.f32 %v773, %v776
    %v780 = vrot.slane %v683, 6
    %v782 = vmul.f32 %v762, %v780
    %v783 = vadd.f32 %v778, %v782
    %v784 = vmul.f32 %v666, %v783
    %785 = vrot.lane.b32.xlu0 %v780, 96
    %v786 = vpop.permute.xlu0 %785
    %v788 = vmul.f32 %v673, %v786
    %790 = vrot.lane.b32.xlu0 %v788, 32
    %v791 = vpop.permute.xlu0 %790
    %v793 = vadd.f32 %v784, %v791
    %v794 = vmul.f32 %v793, %v666
    %796 = vrot.lane.b32.xlu0 %v794, 96
    %v797 = vpop.permute.xlu0 %796
    %799 = vst.msk [vmem:[#allocation2 + $0x8] sm:$0xc] %vm344, %v797
    %v800 = vpack.c.bf16 %v793, %v793
    %v801 = vld [vmem:[%s4] sm:$0xf]
    %v802 = vld [vmem:[%s4 + $0x4] sm:$0xf]
    %v803 = vld [vmem:[%s4 + $0x8] sm:$0xf]
    %v804 = vld [vmem:[%s4 + $0xc] sm:$0xf]
    %v806 = vrot.slane %v800, 1
    %807 = vrot.lane.b32.xlu0 %v806, 96
    %v808 = vpop.permute.xlu0 %807
    %v813 = vunpack.c.l.b16 %v801
    %v814 = vunpack.c.l.b16 %v802
    %v815 = vunpack.c.l.b16 %v803
    %v816 = vunpack.c.l.b16 %v804
    %v817 = vpack.c.b16 %v814, %v813
    %v818 = vpack.c.b16 %v816, %v815
    %v822 = vsel %vm82, %v808, 0
    %824 = vmatprep.subr.bf16.mxu0 0
    %825 = vmatpush1.bf16.msra.mxu0 %v817
    %826 = vmatprep.subr.bf16.mxu0 0
    %827 = vmatpush1.bf16.msra.mxu0 %v818
    %828 = vmatprep.subr.bf16.mxu0 0
    %829 = vmatpush1.bf16.msra.mxu0 0
    %830 = vmatprep.subr.bf16.mxu0 0
    %831 = vmatpush1.bf16.msra.mxu0 0
    %832 = vmatprep.subr.bf16.mxu0 0
    %833 = vmatpush1.bf16.msra.mxu0 0
    %834 = vmatprep.subr.bf16.mxu0 0
    %835 = vmatpush1.bf16.msra.mxu0 0
    %836 = vmatprep.subr.bf16.mxu0 0
    %837 = vmatpush1.bf16.msra.mxu0 0
    %838 = vmatprep.subr.bf16.mxu0 0
    %839 = vmatpush1.bf16.msra.mxu0 0
    %840 = vmatprep.subr.bf16.mxu0 0
    %841 = vmatpush1.bf16.msra.mxu0 0
    %842 = vmatprep.subr.bf16.mxu0 0
    %843 = vmatpush1.bf16.msra.mxu0 0
    %844 = vmatprep.subr.bf16.mxu0 0
    %845 = vmatpush1.bf16.msra.mxu0 0
    %846 = vmatprep.subr.bf16.mxu0 0
    %847 = vmatpush1.bf16.msra.mxu0 0
    %848 = vmatprep.subr.bf16.mxu0 0
    %849 = vmatpush1.bf16.msra.mxu0 0
    %850 = vmatprep.subr.bf16.mxu0 0
    %851 = vmatpush1.bf16.msra.mxu0 0
    %852 = vmatprep.subr.bf16.mxu0 0
    %853 = vmatpush1.bf16.msra.mxu0 0
    %854 = vmatprep.subr.bf16.mxu0 0
    %855 = vmatpush1.bf16.msra.mxu0 0
    %856 = vmatprep.mubr.bf16.mxu0 0
    %857 = vmatmul.mubr.bf16.gmra.mrb[0].mxu0 %v822
    %v858 = vpop.f32.mrb[0].mxu0
    %v859 = vadd.f32 0.0, %v858
    %v860 = vpop.f32.mrb[0].mxu0
    %v861 = vpop.f32.mrb[0].mxu0
    %v862 = vpop.f32.mrb[0].mxu0
    %863 = vdwg.mxu0
    %v865 = vrot.slane %v859, 4
    %v867 = vadd.f32 %v124, %v865
    %v868 = vxor.u32 %v867, 2147483648
    %v869 = vmul.f32 %v868, 1.442695
    %v870 = vpow.pop %v869
    %v871 = vadd.f32 %v870, 1.0
    %v872 = vrcp.pop %v871
    %v873 = vmul.f32 1.0, %v872
    %874 = vrot.lane.b32.xlu0 %v865, 64
    %v875 = vpop.permute.xlu0 %874
    %v877 = vmul.f32 %v873, %v875
    %879 = vrot.lane.b32.xlu0 %v877, 64
    %v880 = vpop.permute.xlu0 %879
    %v882 = vadd.f32 %v124, %v880
    %v883 = vtanh.pop %v882
    %v884 = vsub.f32 1.0, %v873
    %886 = vrot.lane.b32.xlu0 %v883, 96
    %v887 = vpop.permute.xlu0 %886
    %v889 = vmul.f32 %v884, %v887
    %v891 = vrot.slane %v793, 6
    %v893 = vmul.f32 %v873, %v891
    %v894 = vadd.f32 %v889, %v893
    %v895 = vmul.f32 %v666, %v894
    %896 = vrot.lane.b32.xlu0 %v891, 96
    %v897 = vpop.permute.xlu0 %896
    %v899 = vmul.f32 %v673, %v897
    %901 = vrot.lane.b32.xlu0 %v899, 32
    %v902 = vpop.permute.xlu0 %901
    %v904 = vadd.f32 %v895, %v902
    %v905 = vmul.f32 %v904, %v666
    %907 = vrot.lane.b32.xlu0 %v905, 96
    %v908 = vpop.permute.xlu0 %907
    %910 = vst.msk [vmem:[#allocation2 + $0x8] sm:$0x30] %vm456, %v908
    %v911 = vpack.c.bf16 %v904, %v904
    %v912 = vld [vmem:[%s4] sm:$0xf]
    %v913 = vld [vmem:[%s4 + $0x4] sm:$0xf]
    %v914 = vld [vmem:[%s4 + $0x8] sm:$0xf]
    %v915 = vld [vmem:[%s4 + $0xc] sm:$0xf]
    %v917 = vrot.slane %v911, 2
    %918 = vrot.lane.b32.xlu0 %v917, 96
    %v919 = vpop.permute.xlu0 %918
    %v924 = vunpack.c.l.b16 %v912
    %v925 = vunpack.c.l.b16 %v913
    %v926 = vunpack.c.l.b16 %v914
    %v927 = vunpack.c.l.b16 %v915
    %v928 = vpack.c.b16 %v925, %v924
    %v929 = vpack.c.b16 %v927, %v926
    %v933 = vsel %vm82, %v919, 0
    %935 = vmatprep.subr.bf16.mxu0 0
    %936 = vmatpush1.bf16.msra.mxu0 %v928
    %937 = vmatprep.subr.bf16.mxu0 0
    %938 = vmatpush1.bf16.msra.mxu0 %v929
    %939 = vmatprep.subr.bf16.mxu0 0
    %940 = vmatpush1.bf16.msra.mxu0 0
    %941 = vmatprep.subr.bf16.mxu0 0
    %942 = vmatpush1.bf16.msra.mxu0 0
    %943 = vmatprep.subr.bf16.mxu0 0
    %944 = vmatpush1.bf16.msra.mxu0 0
    %945 = vmatprep.subr.bf16.mxu0 0
    %946 = vmatpush1.bf16.msra.mxu0 0
    %947 = vmatprep.subr.bf16.mxu0 0
    %948 = vmatpush1.bf16.msra.mxu0 0
    %949 = vmatprep.subr.bf16.mxu0 0
    %950 = vmatpush1.bf16.msra.mxu0 0
    %951 = vmatprep.subr.bf16.mxu0 0
    %952 = vmatpush1.bf16.msra.mxu0 0
    %953 = vmatprep.subr.bf16.mxu0 0
    %954 = vmatpush1.bf16.msra.mxu0 0
    %955 = vmatprep.subr.bf16.mxu0 0
    %956 = vmatpush1.bf16.msra.mxu0 0
    %957 = vmatprep.subr.bf16.mxu0 0
    %958 = vmatpush1.bf16.msra.mxu0 0
    %959 = vmatprep.subr.bf16.mxu0 0
    %960 = vmatpush1.bf16.msra.mxu0 0
    %961 = vmatprep.subr.bf16.mxu0 0
    %962 = vmatpush1.bf16.msra.mxu0 0
    %963 = vmatprep.subr.bf16.mxu0 0
    %964 = vmatpush1.bf16.msra.mxu0 0
    %965 = vmatprep.subr.bf16.mxu0 0
    %966 = vmatpush1.bf16.msra.mxu0 0
    %967 = vmatprep.mubr.bf16.mxu0 0
    %968 = vmatmul.mubr.bf16.gmra.mrb[0].mxu0 %v933
    %v969 = vpop.f32.mrb[0].mxu0
    %v970 = vadd.f32 0.0, %v969
    %v971 = vpop.f32.mrb[0].mxu0
    %v972 = vpop.f32.mrb[0].mxu0
    %v973 = vpop.f32.mrb[0].mxu0
    %974 = vdwg.mxu0
    %v976 = vrot.slane %v970, 2
    %v978 = vadd.f32 %v124, %v976
    %v979 = vxor.u32 %v978, 2147483648
    %v980 = vmul.f32 %v979, 1.442695
    %v981 = vpow.pop %v980
    %v982 = vadd.f32 %v981, 1.0
    %v983 = vrcp.pop %v982
    %v984 = vmul.f32 1.0, %v983
    %985 = vrot.lane.b32.xlu0 %v976, 64
    %v986 = vpop.permute.xlu0 %985
    %v988 = vmul.f32 %v984, %v986
    %990 = vrot.lane.b32.xlu0 %v988, 64
    %v991 = vpop.permute.xlu0 %990
    %v993 = vadd.f32 %v124, %v991
    %v994 = vtanh.pop %v993
    %v995 = vsub.f32 1.0, %v984
    %997 = vrot.lane.b32.xlu0 %v994, 96
    %v998 = vpop.permute.xlu0 %997
    %v1000 = vmul.f32 %v995, %v998
    %v1002 = vrot.slane %v904, 6
    %v1004 = vmul.f32 %v984, %v1002
    %v1005 = vadd.f32 %v1000, %v1004
    %v1006 = vmul.f32 %v666, %v1005
    %1007 = vrot.lane.b32.xlu0 %v1002, 96
    %v1008 = vpop.permute.xlu0 %1007
    %v1010 = vmul.f32 %v673, %v1008
    %1012 = vrot.lane.b32.xlu0 %v1010, 32
    %v1013 = vpop.permute.xlu0 %1012
    %v1015 = vadd.f32 %v1006, %v1013
    %v1016 = vmul.f32 %v1015, %v666
    %1018 = vrot.lane.b32.xlu0 %v1016, 96
    %v1019 = vpop.permute.xlu0 %1018
    %1021 = vst.msk [vmem:[#allocation2 + $0x8] sm:$0xc0] %vm568, %v1019
    %v1022 = vld [vmem:[#allocation2] sm:$0xff]
    %v1023 = vld [vmem:[#allocation2 + $0x8] sm:$0xff]
    %v1024 = vpack.c.bf16 %v1023, %v1022
    %v1025 = vld [vmem:[%s5] sm:$0xf]
    %v1026 = vld [vmem:[%s5 + $0x4] sm:$0xf]
    %v1027 = vld [vmem:[%s5 + $0x8] sm:$0xf]
    %v1028 = vld [vmem:[%s5 + $0xc] sm:$0xf]
    %v1033 = vunpack.c.l.b16 %v1025
    %v1034 = vunpack.c.l.b16 %v1026
    %v1035 = vunpack.c.l.b16 %v1027
    %v1036 = vunpack.c.l.b16 %v1028
    %v1037 = vpack.c.b16 %v1034, %v1033
    %v1038 = vpack.c.b16 %v1036, %v1035
    %v1042 = vsel %vm82, %v1024, 0
    %1044 = vmatprep.subr.bf16.mxu0 0
    %1045 = vmatpush1.bf16.msra.mxu0 %v1037
    %1046 = vmatprep.subr.bf16.mxu0 0
    %1047 = vmatpush1.bf16.msra.mxu0 %v1038
    %1048 = vmatprep.subr.bf16.mxu0 0
    %1049 = vmatpush1.bf16.msra.mxu0 0
    %1050 = vmatprep.subr.bf16.mxu0 0
    %1051 = vmatpush1.bf16.msra.mxu0 0
    %1052 = vmatprep.subr.bf16.mxu0 0
    %1053 = vmatpush1.bf16.msra.mxu0 0
    %1054 = vmatprep.subr.bf16.mxu0 0
    %1055 = vmatpush1.bf16.msra.mxu0 0
    %1056 = vmatprep.subr.bf16.mxu0 0
    %1057 = vmatpush1.bf16.msra.mxu0 0
    %1058 = vmatprep.subr.bf16.mxu0 0
    %1059 = vmatpush1.bf16.msra.mxu0 0
    %1060 = vmatprep.subr.bf16.mxu0 0
    %1061 = vmatpush1.bf16.msra.mxu0 0
    %1062 = vmatprep.subr.bf16.mxu0 0
    %1063 = vmatpush1.bf16.msra.mxu0 0
    %1064 = vmatprep.subr.bf16.mxu0 0
    %1065 = vmatpush1.bf16.msra.mxu0 0
    %1066 = vmatprep.subr.bf16.mxu0 0
    %1067 = vmatpush1.bf16.msra.mxu0 0
    %1068 = vmatprep.subr.bf16.mxu0 0
    %1069 = vmatpush1.bf16.msra.mxu0 0
    %1070 = vmatprep.subr.bf16.mxu0 0
    %1071 = vmatpush1.bf16.msra.mxu0 0
    %1072 = vmatprep.subr.bf16.mxu0 0
    %1073 = vmatpush1.bf16.msra.mxu0 0
    %1074 = vmatprep.subr.bf16.mxu0 0
    %1075 = vmatpush1.bf16.msra.mxu0 0
    %1076 = vmatprep.mubr.bf16.mxu0 0
    %1077 = vmatmul.mubr.bf16.gmra.mrb[0].mxu0 %v1042
    %v1078 = vpop.f32.mrb[0].mxu0
    %v1079 = vadd.f32 0.0, %v1078
    %v1080 = vpop.f32.mrb[0].mxu0
    %v1081 = vpop.f32.mrb[0].mxu0
    %v1082 = vadd.f32 0.0, %v1081
    %v1083 = vpop.f32.mrb[0].mxu0
    %1084 = vdwg.mxu0
    %v1085 = vpack.c.bf16 %v1015, %v1015
    %v1086 = vld [vmem:[#allocation6] sm:$0xf]
    %v1087 = vld [vmem:[#allocation6 + $0x4] sm:$0xf]
    %v1088 = vld [vmem:[#allocation6 + $0x8] sm:$0xf]
    %v1089 = vld [vmem:[#allocation6 + $0xc] sm:$0xf]
    %v1091 = vrot.slane %v1085, 3
    %1092 = vrot.lane.b32.xlu0 %v1091, 96
    %v1093 = vpop.permute.xlu0 %1092
    %v1098 = vunpack.c.l.b16 %v1086
    %v1099 = vunpack.c.l.b16 %v1087
    %v1100 = vunpack.c.l.b16 %v1088
    %v1101 = vunpack.c.l.b16 %v1089
    %v1102 = vpack.c.b16 %v1099, %v1098
    %v1103 = vpack.c.b16 %v1101, %v1100
    %v1107 = vsel %vm82, %v1093, 0
    %1109 = vmatprep.subr.bf16.mxu0 0
    %1110 = vmatpush1.bf16.msra.mxu0 %v1102
    %1111 = vmatprep.subr.bf16.mxu0 0
    %1112 = vmatpush1.bf16.msra.mxu0 %v1103
    %1113 = vmatprep.subr.bf16.mxu0 0
    %1114 = vmatpush1.bf16.msra.mxu0 0
    %1115 = vmatprep.subr.bf16.mxu0 0
    %1116 = vmatpush1.bf16.msra.mxu0 0
    %1117 = vmatprep.subr.bf16.mxu0 0
    %1118 = vmatpush1.bf16.msra.mxu0 0
    %1119 = vmatprep.subr.bf16.mxu0 0
    %1120 = vmatpush1.bf16.msra.mxu0 0
    %1121 = vmatprep.subr.bf16.mxu0 0
    %1122 = vmatpush1.bf16.msra.mxu0 0
    %1123 = vmatprep.subr.bf16.mxu0 0
    %1124 = vmatpush1.bf16.msra.mxu0 0
    %1125 = vmatprep.subr.bf16.mxu0 0
    %1126 = vmatpush1.bf16.msra.mxu0 0
    %1127 = vmatprep.subr.bf16.mxu0 0
    %1128 = vmatpush1.bf16.msra.mxu0 0
    %1129 = vmatprep.subr.bf16.mxu0 0
    %1130 = vmatpush1.bf16.msra.mxu0 0
    %1131 = vmatprep.subr.bf16.mxu0 0
    %1132 = vmatpush1.bf16.msra.mxu0 0
    %1133 = vmatprep.subr.bf16.mxu0 0
    %1134 = vmatpush1.bf16.msra.mxu0 0
    %1135 = vmatprep.subr.bf16.mxu0 0
    %1136 = vmatpush1.bf16.msra.mxu0 0
    %1137 = vmatprep.subr.bf16.mxu0 0
    %1138 = vmatpush1.bf16.msra.mxu0 0
    %1139 = vmatprep.subr.bf16.mxu0 0
    %1140 = vmatpush1.bf16.msra.mxu0 0
    %1141 = vmatprep.mubr.bf16.mxu0 0
    %1142 = vmatmul.mubr.bf16.gmra.mrb[0].mxu0 %v1107
    %v1143 = vpop.f32.mrb[0].mxu0
    %v1144 = vadd.f32 0.0, %v1143
    %v1145 = vpop.f32.mrb[0].mxu0
    %v1146 = vpop.f32.mrb[0].mxu0
    %v1147 = vpop.f32.mrb[0].mxu0
    %1148 = vdwg.mxu0
    %v1149 = vld [vmem:[%s2] sm:$0xff]
    %v1150 = vld [vmem:[%s2 + $0x8] sm:$0xff]
    %v1151 = vld [vmem:[%s7] sm:$0x1]
    %1153 = vset.pattern.permute.xlu0 0
    %1154 = vperm.xlu0 %1153, %v1149
    %v1155 = vpop.permute.xlu0 %1154
    %v1157 = vmul.f32 %v1155, %v1144
    %v1158 = vadd.f32 %v1079, %v1157
    %v1159 = vxor.u32 %v1158, 2147483648
    %v1160 = vmul.f32 %v1159, 1.442695
    %v1161 = vpow.pop %v1160
    %v1162 = vadd.f32 %v1161, 1.0
    %v1163 = vrcp.pop %v1162
    %v1164 = vmul.f32 1.0, %v1163
    %v1166 = vlaneseq
    %v1167 = vshrl.u32 %v1166, 7
    %v1168 = vsub.s32 0, %v1167
    %v1169 = vrot.slane %v1151, %v1168
    %v1171 = vmul.f32 %v1164, %v1169
    %v1172 = vsel %vm233, %v1171, 0.0
    %1173 = vadd.xlane.f32.xlu0 %v1172
    %v1174 = vpop.xlane.xlu0 %1173
    %v1175 = vmul.f32 %v1174, %v1022
    %v1176 = vadd.f32 %v1175, 0.0
    %v1178 = vrot.slane %v1144, 6
    %v1180 = vmul.f32 %v1155, %v1178
    %v1181 = vadd.f32 %v1079, %v1180
    %v1182 = vxor.u32 %v1181, 2147483648
    %v1183 = vmul.f32 %v1182, 1.442695
    %v1184 = vpow.pop %v1183
    %v1185 = vadd.f32 %v1184, 1.0
    %v1186 = vrcp.pop %v1185
    %v1187 = vmul.f32 1.0, %v1186
    %v1188 = vmul.f32 %v1187, %v1169
    %v1189 = vsel %vm344, %v1188, 0.0
    %1190 = vadd.xlane.f32.xlu0 %v1189
    %v1191 = vpop.xlane.xlu0 %1190
    %v1192 = vmul.f32 %v1191, %v1022
    %v1194 = vrot.slane %v1192, 2
    %v1196 = vadd.f32 %v1176, %v1194
    %v1197 = vrot.slane %v1144, 4
    %v1199 = vmul.f32 %v1155, %v1197
    %v1200 = vadd.f32 %v1079, %v1199
    %v1201 = vxor.u32 %v1200, 2147483648
    %v1202 = vmul.f32 %v1201, 1.442695
    %v1203 = vpow.pop %v1202
    %v1204 = vadd.f32 %v1203, 1.0
    %v1205 = vrcp.pop %v1204
    %v1206 = vmul.f32 1.0, %v1205
    %v1207 = vmul.f32 %v1206, %v1169
    %v1208 = vsel %vm456, %v1207, 0.0
    %1209 = vadd.xlane.f32.xlu0 %v1208
    %v1210 = vpop.xlane.xlu0 %1209
    %v1211 = vmul.f32 %v1210, %v1022
    %v1213 = vrot.slane %v1211, 4
    %v1215 = vadd.f32 %v1196, %v1213
    %v1216 = vrot.slane %v1144, 2
    %v1218 = vmul.f32 %v1155, %v1216
    %v1219 = vadd.f32 %v1079, %v1218
    %v1220 = vxor.u32 %v1219, 2147483648
    %v1221 = vmul.f32 %v1220, 1.442695
    %v1222 = vpow.pop %v1221
    %v1223 = vadd.f32 %v1222, 1.0
    %v1224 = vrcp.pop %v1223
    %v1225 = vmul.f32 1.0, %v1224
    %v1226 = vmul.f32 %v1225, %v1169
    %v1227 = vsel %vm568, %v1226, 0.0
    %1228 = vadd.xlane.f32.xlu0 %v1227
    %v1229 = vpop.xlane.xlu0 %1228
    %v1230 = vmul.f32 %v1229, %v1022
    %v1232 = vrot.slane %v1230, 6
    %v1234 = vadd.f32 %v1215, %v1232
    %1236 = vset.pattern.permute.xlu0 0
    %1237 = vperm.xlu0 %1236, %v1150
    %v1238 = vpop.permute.xlu0 %1237
    %v1240 = vmul.f32 %v1238, %v1144
    %v1241 = vadd.f32 %v1082, %v1240
    %v1242 = vxor.u32 %v1241, 2147483648
    %v1243 = vmul.f32 %v1242, 1.442695
    %v1244 = vpow.pop %v1243
    %v1245 = vadd.f32 %v1244, 1.0
    %v1246 = vrcp.pop %v1245
    %v1247 = vmul.f32 1.0, %v1246
    %v1248 = vmul.f32 %v1247, %v1169
    %v1249 = vsel %vm233, %v1248, 0.0
    %1250 = vadd.xlane.f32.xlu0 %v1249
    %v1251 = vpop.xlane.xlu0 %1250
    %v1252 = vmul.f32 %v1251, %v1023
    %v1253 = vadd.f32 %v1234, %v1252
    %v1254 = vmul.f32 %v1238, %v1178
    %v1255 = vadd.f32 %v1082, %v1254
    %v1256 = vxor.u32 %v1255, 2147483648
    %v1257 = vmul.f32 %v1256, 1.442695
    %v1258 = vpow.pop %v1257
    %v1259 = vadd.f32 %v1258, 1.0
    %v1260 = vrcp.pop %v1259
    %v1261 = vmul.f32 1.0, %v1260
    %v1262 = vmul.f32 %v1261, %v1169
    %v1263 = vsel %vm344, %v1262, 0.0
    %1264 = vadd.xlane.f32.xlu0 %v1263
    %v1265 = vpop.xlane.xlu0 %1264
    %v1266 = vmul.f32 %v1265, %v1023
    %v1268 = vrot.slane %v1266, 2
    %v1270 = vadd.f32 %v1253, %v1268
    %v1271 = vmul.f32 %v1238, %v1197
    %v1272 = vadd.f32 %v1082, %v1271
    %v1273 = vxor.u32 %v1272, 2147483648
    %v1274 = vmul.f32 %v1273, 1.442695
    %v1275 = vpow.pop %v1274
    %v1276 = vadd.f32 %v1275, 1.0
    %v1277 = vrcp.pop %v1276
    %v1278 = vmul.f32 1.0, %v1277
    %v1279 = vmul.f32 %v1278, %v1169
    %v1280 = vsel %vm456, %v1279, 0.0
    %1281 = vadd.xlane.f32.xlu0 %v1280
    %v1282 = vpop.xlane.xlu0 %1281
    %v1283 = vmul.f32 %v1282, %v1023
    %v1285 = vrot.slane %v1283, 4
    %v1287 = vadd.f32 %v1270, %v1285
    %v1288 = vmul.f32 %v1238, %v1216
    %v1289 = vadd.f32 %v1082, %v1288
    %v1290 = vxor.u32 %v1289, 2147483648
    %v1291 = vmul.f32 %v1290, 1.442695
    %v1292 = vpow.pop %v1291
    %v1293 = vadd.f32 %v1292, 1.0
    %v1294 = vrcp.pop %v1293
    %v1295 = vmul.f32 1.0, %v1294
    %v1296 = vmul.f32 %v1295, %v1169
    %v1297 = vsel %vm568, %v1296, 0.0
    %1298 = vadd.xlane.f32.xlu0 %v1297
    %v1299 = vpop.xlane.xlu0 %1298
    %v1300 = vmul.f32 %v1299, %v1023
    %v1302 = vrot.slane %v1300, 6
    %v1304 = vadd.f32 %v1287, %v1302
    %1305 = vst.msk [vmem:[#allocation8] sm:$0x3] %vm233, %v1304
    %vm1306 = vcmask 523526
    %1307 = vst.msk [vmem:[#allocation8 - $0x6] sm:$0xc0] %vm1306, %v1015
    // Predicated region
    $region42: #{tpu_custom_call.1} parent=1 // pred_check
      _
    $region43: #{tpu_custom_call.1} parent=1 // pred_check_branch
      %1309 = sbr.rel (0) target = $region45
    $region44: #{tpu_custom_call.1} parent=1 // pred_region
      %s1311 = ssub.s32 32, 32
      %1312 = vsyncadd [#allocation5], %s1311
      %s1314 = sshll.u32 [#allocation8], 4
      %s1315 = int_to_ptr.vmem [resolvable:$true] %s1314
      %1317 = dma.vmem_to_hbm [thread:$0]  %s1315, 32, %s8, [#allocation5]
    $region45: #{tpu_custom_call.1} parent=1 // pred_fallthru
      _
    // Predicated region
    $region46: #{tpu_custom_call.1} parent=1 // pred_check
      _
    $region47: #{tpu_custom_call.1} parent=1 // pred_check_branch
      %1319 = sbr.rel (0) target = $region49
    $region48: #{tpu_custom_call.1} parent=1 // pred_region
      %1320 = dma.done [#allocation5], 32
    $region49: #{tpu_custom_call.1} parent=1 // pred_fallthru
      _
    %1321 = vsyncpa [#allocation4], 1
    %1322 = vsyncpa [#allocation7], 1
    %1323 = vsyncpa [#allocation5], 1

</llo_original>
